<compile_context>
chip_gen: v7x
topology: tpu7x:2x2x1
jax: 0.10.0
libtpu: 0.0.40
codegen_flags: <defaults>
</compile_context>

<pallas_src>
import functools

import jax
import jax.numpy as jnp
from jax.experimental import pallas as pl
from jax.experimental.pallas import tpu as pltpu


def _round_up(x, m):
    return (x + m - 1) // m * m


def _pick_tm(m, tile_m):
    """Row-tile size: multiple of 8, <= tile_m, and >= 2 grid steps if possible."""
    tm = min(tile_m, _round_up(max(m // 2, 8), 8))
    return min(tm, _round_up(m, 8))


# ---------------------------------------------------------------------------
# Pallas kernels
# ---------------------------------------------------------------------------

def _matmul_kernel(x_ref, w_ref, o_ref):
    """o = x @ w (per-pixel linear projection == 1x1 conv), f32 accumulate.

    The per-scale bias, the linear_fuse slice and the folded-BN scale are all
    pre-multiplied into w at trace time, so no bias add is needed here.
    """
    o_ref[...] = jnp.dot(
        x_ref[...], w_ref[...], preferred_element_type=jnp.float32
    ).astype(o_ref.dtype)


def _fuse_pred_kernel(x4_ref, x3_ref, x2_ref, x1_ref,
                      shift_ref, wp_ref, bp_ref, o_ref):
    """Fused head on one row tile (w_fuse & BN-scale already folded upstream).

    h = x4 + x3 + x2 + x1 + shift_total     (== BN(concat @ Wf), eval mode)
    h = ReLU(h)
    o = h @ Wp + bp                          (linear_pred, K padded to 128)
    """
    h = (x4_ref[...].astype(jnp.float32) + x3_ref[...].astype(jnp.float32)
         + x2_ref[...].astype(jnp.float32) + x1_ref[...].astype(jnp.float32))
    h = h + shift_ref[...]
    h = jnp.maximum(h, 0.0)
    out = jnp.dot(h.astype(wp_ref.dtype), wp_ref[...],
                  preferred_element_type=jnp.float32)
    o_ref[...] = (out + bp_ref[...]).astype(o_ref.dtype)


# ---------------------------------------------------------------------------
# Pallas wrappers
# ---------------------------------------------------------------------------

def pallas_project(x2d, w, tile_m=512):
    """x2d: (M, Cin) bf16, w: (Cin, Ep) bf16 -> (M, Ep) bf16."""
    M, Cin = x2d.shape
    Ep = w.shape[1]
    tm = _pick_tm(M, tile_m)
    grid = pl.cdiv(M, tm)
    return pl.pallas_call(
        _matmul_kernel,
        out_shape=jax.ShapeDtypeStruct((M, Ep), jnp.bfloat16),
        grid=(grid,),
        in_specs=[
            pl.BlockSpec((tm, Cin), lambda i: (i, 0)),
            pl.BlockSpec((Cin, Ep), lambda i: (0, 0)),
        ],
        out_specs=pl.BlockSpec((tm, Ep), lambda i: (i, 0)),
        compiler_params=pltpu.CompilerParams(
            dimension_semantics=("parallel",)),
    )(x2d, w)


def pallas_fuse_pred(x4, x3, x2, x1, shift, wp, bp, tile_m=512):
    """Four (M, Ep) bf16 streams -> (M, Kp) f32 logits (sum + shift + ReLU + pred)."""
    M, Ep = x4.shape
    Kp = wp.shape[1]
    tm = _pick_tm(M, tile_m)
    grid = pl.cdiv(M, tm)
    row_spec = pl.BlockSpec((tm, Ep), lambda i: (i, 0))
    return pl.pallas_call(
        _fuse_pred_kernel,
        out_shape=jax.ShapeDtypeStruct((M, Kp), jnp.float32),
        grid=(grid,),
        in_specs=[row_spec, row_spec, row_spec, row_spec,
                  pl.BlockSpec((1, Ep), lambda i: (0, 0)),
                  pl.BlockSpec((Ep, Kp), lambda i: (0, 0)),
                  pl.BlockSpec((1, Kp), lambda i: (0, 0))],
        out_specs=pl.BlockSpec((tm, Kp), lambda i: (i, 0)),
        compiler_params=pltpu.CompilerParams(
            dimension_semantics=("parallel",)),
    )(x4, x3, x2, x1, shift, wp, bp)


# ---------------------------------------------------------------------------
# Plain-JAX glue: bilinear upsample as two interpolation matmuls
# (PyTorch align_corners=False semantics; MXU-friendly, no gathers)
# ---------------------------------------------------------------------------

def _interp_matrix(out_sz, in_sz):
    i = jnp.arange(out_sz, dtype=jnp.float32)
    src = (i + 0.5) * (in_sz / out_sz) - 0.5
    src = jnp.clip(src, 0.0, float(in_sz - 1))
    i0 = jnp.floor(src).astype(jnp.int32)
    i1 = jnp.minimum(i0 + 1, in_sz - 1)
    frac = src - i0.astype(jnp.float32)
    m0 = jax.nn.one_hot(i0, in_sz, dtype=jnp.float32) * (1.0 - frac)[:, None]
    m1 = jax.nn.one_hot(i1, in_sz, dtype=jnp.float32) * frac[:, None]
    return m0 + m1          # (out_sz, in_sz), rows sum to 1


def bilinear_resize_nhwc(x, out_h, out_w):
    """x: (N, H, W, C) -> (N, out_h, out_w, C), bilinear, align_corners=False."""
    N, H, W, C = x.shape
    if H == out_h and W == out_w:
        return x
    ah = _interp_matrix(out_h, H).astype(x.dtype)     # bf16 interp matrices
    aw = _interp_matrix(out_w, W).astype(x.dtype)
    t = jnp.einsum("oh,nhwc->nowc", ah, x,
                   preferred_element_type=jnp.float32).astype(x.dtype)
    y = jnp.einsum("pw,nowc->nopc", aw, t, preferred_element_type=jnp.float32)
    return y.astype(x.dtype)


# ---------------------------------------------------------------------------
# SegFormerHead parameters + forward
# ---------------------------------------------------------------------------

def init_params(key, embedding_dim, in_channels, num_class):
    c1c, c2c, c3c, c4c = in_channels
    keys = jax.random.split(key, 16)
    p = {}

    def lin(kw, kb, cin, cout):
        w = 0.02 * jax.random.normal(kw, (cin, cout), jnp.float32)
        b = 0.01 * jax.random.normal(kb, (cout,), jnp.float32)
        return w, b

    p["w_c1"], p["b_c1"] = lin(keys[0], keys[1], c1c, embedding_dim)
    p["w_c2"], p["b_c2"] = lin(keys[2], keys[3], c2c, embedding_dim)
    p["w_c3"], p["b_c3"] = lin(keys[4], keys[5], c3c, embedding_dim)
    p["w_c4"], p["b_c4"] = lin(keys[6], keys[7], c4c, embedding_dim)

    # linear_fuse: Conv2d(4E, E, 1, bias=False) + SyncBN + ReLU (eval mode)
    p["w_fuse"] = 0.02 * jax.random.normal(
        keys[8], (4 * embedding_dim, embedding_dim), jnp.float32)
    gamma = 1.0 + 0.1 * jax.random.normal(keys[9], (embedding_dim,), jnp.float32)
    beta = 0.1 * jax.random.normal(keys[10], (embedding_dim,), jnp.float32)
    running_mean = 0.1 * jax.random.normal(keys[11], (embedding_dim,), jnp.float32)
    running_var = jnp.abs(
        1.0 + 0.1 * jax.random.normal(keys[12], (embedding_dim,), jnp.float32))
    eps = 1e-5
    p["bn_scale"] = gamma / jnp.sqrt(running_var + eps)
    p["bn_shift"] = beta - running_mean * p["bn_scale"]

    # linear_pred: Conv2d(E, num_class, 1) with bias
    p["w_pred"], p["b_pred"] = lin(keys[13], keys[14], embedding_dim, num_class)
    return p


def segformer_head_forward(params, c1, c2, c3, c4, embedding_dim, tile_m=512):
    """Inputs c1..c4 are NCHW (PyTorch convention). Output is NCHW f32."""
    n = c1.shape[0]
    h1, w1 = c1.shape[2], c1.shape[3]
    E = embedding_dim
    Ep = _round_up(max(E, 128), 128)                 # lane-dense embedding width
    num_class = params["b_pred"].shape[0]
    Kp = _round_up(max(num_class, 128), 128)         # lane-dense logits width
    cdt = jnp.bfloat16

    wf = params["w_fuse"]                            # (4E, E), f32
    scale = params["bn_scale"]

    # --- trace-time weight folding (f32, then cast) -------------------------
    # concat([_c4,_c3,_c2,_c1]) @ Wf == sum_s _cs @ Wf_s, and resize commutes
    # with channel mixing; interp rows sum to 1 so biases pass through resize.
    def fold(w, b, slot):
        wf_s = wf[slot * E:(slot + 1) * E]           # (E, E)
        return (w @ wf_s) * scale[None, :], (b @ wf_s) * scale

    w4f, b4f = fold(params["w_c4"], params["b_c4"], 0)
    w3f, b3f = fold(params["w_c3"], params["b_c3"], 1)
    w2f, b2f = fold(params["w_c2"], params["b_c2"], 2)
    w1f, b1f = fold(params["w_c1"], params["b_c1"], 3)
    shift_total = params["bn_shift"] + b4f + b3f + b2f + b1f   # (E,)

    def pad_e(w):                                    # zero-pad channels to Ep
        return jnp.pad(w, ((0, 0), (0, Ep - E))).astype(cdt)

    w4f, w3f, w2f, w1f = pad_e(w4f), pad_e(w3f), pad_e(w2f), pad_e(w1f)
    shift_p = jnp.pad(shift_total, (0, Ep - E)).reshape(1, Ep).astype(jnp.float32)
    wp_p = jnp.pad(params["w_pred"],
                   ((0, Ep - E), (0, Kp - num_class))).astype(cdt)
    bp_p = jnp.pad(params["b_pred"],
                   (0, Kp - num_class)).reshape(1, Kp).astype(jnp.float32)

    # --- per-scale projection (1x1-conv-equivalent matmul, folded weights) --
    def project(x_nchw, w_fold):
        x = jnp.transpose(x_nchw, (0, 2, 3, 1)).astype(cdt)   # NCHW -> NHWC
        N, H, W, C = x.shape
        y = pallas_project(x.reshape(N * H * W, C), w_fold, tile_m=tile_m)
        return y.reshape(N, H, W, Ep)

    _c4 = bilinear_resize_nhwc(project(c4, w4f), h1, w1)
    _c3 = bilinear_resize_nhwc(project(c3, w3f), h1, w1)
    _c2 = bilinear_resize_nhwc(project(c2, w2f), h1, w1)
    _c1 = project(c1, w1f)

    # --- fused head: sum streams + shift + ReLU + linear_pred ---------------
    M = n * h1 * w1
    out2d = pallas_fuse_pred(
        _c4.reshape(M, Ep), _c3.reshape(M, Ep),
        _c2.reshape(M, Ep), _c1.reshape(M, Ep),
        shift_p, wp_p, bp_p, tile_m=tile_m)

    out = out2d[:, :num_class].reshape(n, h1, w1, num_class)
    return jnp.transpose(out, (0, 3, 1, 2))          # back to NCHW


# ---------------------------------------------------------------------------
# Pure-JAX f32 reference (mirrors the PyTorch module op-for-op)
# ---------------------------------------------------------------------------

def _resize_f32(x, out_h, out_w):
    N, H, W, C = x.shape
    if H == out_h and W == out_w:
        return x
    ah = _interp_matrix(out_h, H)
    aw = _interp_matrix(out_w, W)
    t = jnp.einsum("oh,nhwc->nowc", ah, x)
    return jnp.einsum("pw,nowc->nopc", aw, t)


def segformer_head_reference(params, c1, c2, c3, c4, embedding_dim):
    n, _, h1, w1 = c1.shape

    def proj(x, w, b):
        return jnp.transpose(x, (0, 2, 3, 1)) @ w + b   # NHWC (N,H,W,E)

    _c4 = _resize_f32(proj(c4, params["w_c4"], params["b_c4"]), h1, w1)
    _c3 = _resize_f32(proj(c3, params["w_c3"], params["b_c3"]), h1, w1)
    _c2 = _resize_f32(proj(c2, params["w_c2"], params["b_c2"]), h1, w1)
    _c1 = proj(c1, params["w_c1"], params["b_c1"])
    cat = jnp.concatenate([_c4, _c3, _c2, _c1], axis=-1)   # (N,H,W,4E)
    h = cat @ params["w_fuse"]
    h = h * params["bn_scale"] + params["bn_shift"]
    h = jnp.maximum(h, 0.0)
    out = h @ params["w_pred"] + params["b_pred"]
    return jnp.transpose(out, (0, 3, 1, 2))


# ---------------------------------------------------------------------------
# Demo
# ---------------------------------------------------------------------------

if __name__ == "__main__":
    embedding_dim = 32
    in_channels = (8, 16, 32, 64)
    num_class = 4

    key = jax.random.PRNGKey(0)
    k_params, k1, k2, k3, k4 = jax.random.split(key, 5)
    params = init_params(k_params, embedding_dim, in_channels, num_class)

    # SegFormer pyramid: c1 highest resolution, c4 lowest (strides 4/8/16/32).
    c1 = jax.random.normal(k1, (2, in_channels[0], 16, 16), jnp.float32)
    c2 = jax.random.normal(k2, (2, in_channels[1], 8, 8), jnp.float32)
    c3 = jax.random.normal(k3, (2, in_channels[2], 4, 4), jnp.float32)
    c4 = jax.random.normal(k4, (2, in_channels[3], 2, 2), jnp.float32)

    fwd = jax.jit(functools.partial(segformer_head_forward,
                                    embedding_dim=embedding_dim))
    out = fwd(params, c1, c2, c3, c4)
    jax.block_until_ready(out)

    assert out.shape == (2, num_class, 16, 16), out.shape
    assert out.dtype == jnp.float32

    # tolerance-asserted pure-JAX reference (bf16 compute path => loose tol)
    ref = segformer_head_reference(params, c1, c2, c3, c4, embedding_dim)
    max_err = float(jnp.max(jnp.abs(out - ref)))
    assert max_err < 5e-2, f"max abs err vs f32 reference: {max_err}"

    print("KERNEL_OK")
</pallas_src>

<mosaic_0001>
module attributes {stable_mosaic.version = 11 : i64} {
  func.func @_matmul_kernel(%arg0: i32, %arg1: memref<16x32xbf16, #tpu.memory_space<vmem>>, %arg2: memref<32x128xbf16, #tpu.memory_space<vmem>>, %arg3: memref<16x128xbf16, #tpu.memory_space<vmem>>) attributes {dimension_semantics = [#tpu.dimension_semantics<parallel>], iteration_bounds = array<i64: 2>, scalar_prefetch = 0 : i64, scratch_operands = 0 : i64, tpu.core_type = #tpu.core_type<tc>, window_params = [{transform_indices = @transform_0, window_bounds = array<i64: 16, 32>}, {pipeline_mode = #tpu.pipeline_mode<synchronous>, transform_indices = @transform_1, window_bounds = array<i64: 32, 128>}, {transform_indices = @transform_2, window_bounds = array<i64: 16, 128>}]} {
    %c0 = arith.constant 0 : index
    %c0_0 = arith.constant 0 : index
    %0 = vector.load %arg1[%c0, %c0_0] : memref<16x32xbf16, #tpu.memory_space<vmem>>, vector<16x32xbf16>
    %c0_1 = arith.constant 0 : index
    %c0_2 = arith.constant 0 : index
    %1 = vector.load %arg2[%c0_1, %c0_2] : memref<32x128xbf16, #tpu.memory_space<vmem>>, vector<32x128xbf16>
    %cst = arith.constant dense<0.000000e+00> : vector<16x128xf32>
    %2 = tpu.matmul %0, %1, %cst {dimension_numbers = #tpu.dot_dimension_numbers<[1], [0], [0], [1], [0, 0, 1, 1], [], []>} : vector<16x32xbf16>, vector<32x128xbf16>, vector<16x128xf32> -> vector<16x128xf32>
    %3 = arith.truncf %2 : vector<16x128xf32> to vector<16x128xbf16>
    %c0_3 = arith.constant 0 : index
    %c0_4 = arith.constant 0 : index
    %4 = vector.load %arg3[%c0_3, %c0_4] : memref<16x128xbf16, #tpu.memory_space<vmem>>, vector<16x128xbf16>
    tpu.vector_store %arg3[%c0_3, %c0_4], %3 {strides = array<i32>} : memref<16x128xbf16, #tpu.memory_space<vmem>>, vector<16x128xbf16>,
    return
  }
  func.func @transform_0(%arg0: i32) -> (i32, i32) {
    %c0_i32 = arith.constant 0 : i32
    %c0_i32_0 = arith.constant 0 : i32
    return %arg0, %c0_i32 : i32, i32
  }
  func.func @transform_1(%arg0: i32) -> (i32, i32) {
    %c0_i32 = arith.constant 0 : i32
    %c0_i32_0 = arith.constant 0 : i32
    %c0_i32_1 = arith.constant 0 : i32
    return %c0_i32, %c0_i32_0 : i32, i32
  }
  func.func @transform_2(%arg0: i32) -> (i32, i32) {
    %c0_i32 = arith.constant 0 : i32
    %c0_i32_0 = arith.constant 0 : i32
    return %arg0, %c0_i32 : i32, i32
  }
}

module attributes {stable_mosaic.version = 11 : i64} {
  func.func @_matmul_kernel(%arg0: i32, %arg1: memref<8x64xbf16, #tpu.memory_space<vmem>>, %arg2: memref<64x128xbf16, #tpu.memory_space<vmem>>, %arg3: memref<8x128xbf16, #tpu.memory_space<vmem>>) attributes {dimension_semantics = [#tpu.dimension_semantics<parallel>], iteration_bounds = array<i64: 1>, scalar_prefetch = 0 : i64, scratch_operands = 0 : i64, tpu.core_type = #tpu.core_type<tc>, window_params = [{transform_indices = @transform_0, window_bounds = array<i64: 8, 64>}, {pipeline_mode = #tpu.pipeline_mode<synchronous>, transform_indices = @transform_1, window_bounds = array<i64: 64, 128>}, {transform_indices = @transform_2, window_bounds = array<i64: 8, 128>}]} {
    %c0 = arith.constant 0 : index
    %c0_0 = arith.constant 0 : index
    %0 = vector.load %arg1[%c0, %c0_0] : memref<8x64xbf16, #tpu.memory_space<vmem>>, vector<8x64xbf16>
    %c0_1 = arith.constant 0 : index
    %c0_2 = arith.constant 0 : index
    %1 = vector.load %arg2[%c0_1, %c0_2] : memref<64x128xbf16, #tpu.memory_space<vmem>>, vector<64x128xbf16>
    %cst = arith.constant dense<0.000000e+00> : vector<8x128xf32>
    %2 = tpu.matmul %0, %1, %cst {dimension_numbers = #tpu.dot_dimension_numbers<[1], [0], [0], [1], [0, 0, 1, 1], [], []>} : vector<8x64xbf16>, vector<64x128xbf16>, vector<8x128xf32> -> vector<8x128xf32>
    %3 = arith.truncf %2 : vector<8x128xf32> to vector<8x128xbf16>
    %c0_3 = arith.constant 0 : index
    %c0_4 = arith.constant 0 : index
    %4 = vector.load %arg3[%c0_3, %c0_4] : memref<8x128xbf16, #tpu.memory_space<vmem>>, vector<8x128xbf16>
    tpu.vector_store %arg3[%c0_3, %c0_4], %3 {strides = array<i32>} : memref<8x128xbf16, #tpu.memory_space<vmem>>, vector<8x128xbf16>,
    return
  }
  func.func @transform_0(%arg0: i32) -> (i32, i32) {
    %c0_i32 = arith.constant 0 : i32
    %c0_i32_0 = arith.constant 0 : i32
    return %arg0, %c0_i32 : i32, i32
  }
  func.func @transform_1(%arg0: i32) -> (i32, i32) {
    %c0_i32 = arith.constant 0 : i32
    %c0_i32_0 = arith.constant 0 : i32
    %c0_i32_1 = arith.constant 0 : i32
    return %c0_i32, %c0_i32_0 : i32, i32
  }
  func.func @transform_2(%arg0: i32) -> (i32, i32) {
    %c0_i32 = arith.constant 0 : i32
    %c0_i32_0 = arith.constant 0 : i32
    return %arg0, %c0_i32 : i32, i32
  }
}

module attributes {stable_mosaic.version = 11 : i64} {
  func.func @_matmul_kernel(%arg0: i32, %arg1: memref<64x16xbf16, #tpu.memory_space<vmem>>, %arg2: memref<16x128xbf16, #tpu.memory_space<vmem>>, %arg3: memref<64x128xbf16, #tpu.memory_space<vmem>>) attributes {dimension_semantics = [#tpu.dimension_semantics<parallel>], iteration_bounds = array<i64: 2>, scalar_prefetch = 0 : i64, scratch_operands = 0 : i64, tpu.core_type = #tpu.core_type<tc>, window_params = [{transform_indices = @transform_0, window_bounds = array<i64: 64, 16>}, {pipeline_mode = #tpu.pipeline_mode<synchronous>, transform_indices = @transform_1, window_bounds = array<i64: 16, 128>}, {transform_indices = @transform_2, window_bounds = array<i64: 64, 128>}]} {
    %c0 = arith.constant 0 : index
    %c0_0 = arith.constant 0 : index
    %0 = vector.load %arg1[%c0, %c0_0] : memref<64x16xbf16, #tpu.memory_space<vmem>>, vector<64x16xbf16>
    %c0_1 = arith.constant 0 : index
    %c0_2 = arith.constant 0 : index
    %1 = vector.load %arg2[%c0_1, %c0_2] : memref<16x128xbf16, #tpu.memory_space<vmem>>, vector<16x128xbf16>
    %cst = arith.constant dense<0.000000e+00> : vector<64x128xf32>
    %2 = tpu.matmul %0, %1, %cst {dimension_numbers = #tpu.dot_dimension_numbers<[1], [0], [0], [1], [0, 0, 1, 1], [], []>} : vector<64x16xbf16>, vector<16x128xbf16>, vector<64x128xf32> -> vector<64x128xf32>
    %3 = arith.truncf %2 : vector<64x128xf32> to vector<64x128xbf16>
    %c0_3 = arith.constant 0 : index
    %c0_4 = arith.constant 0 : index
    %4 = vector.load %arg3[%c0_3, %c0_4] : memref<64x128xbf16, #tpu.memory_space<vmem>>, vector<64x128xbf16>
    tpu.vector_store %arg3[%c0_3, %c0_4], %3 {strides = array<i32>} : memref<64x128xbf16, #tpu.memory_space<vmem>>, vector<64x128xbf16>,
    return
  }
  func.func @transform_0(%arg0: i32) -> (i32, i32) {
    %c0_i32 = arith.constant 0 : i32
    %c0_i32_0 = arith.constant 0 : i32
    return %arg0, %c0_i32 : i32, i32
  }
  func.func @transform_1(%arg0: i32) -> (i32, i32) {
    %c0_i32 = arith.constant 0 : i32
    %c0_i32_0 = arith.constant 0 : i32
    %c0_i32_1 = arith.constant 0 : i32
    return %c0_i32, %c0_i32_0 : i32, i32
  }
  func.func @transform_2(%arg0: i32) -> (i32, i32) {
    %c0_i32 = arith.constant 0 : i32
    %c0_i32_0 = arith.constant 0 : i32
    return %arg0, %c0_i32 : i32, i32
  }
}

module attributes {stable_mosaic.version = 11 : i64} {
  func.func @_matmul_kernel(%arg0: i32, %arg1: memref<256x8xbf16, #tpu.memory_space<vmem>>, %arg2: memref<8x128xbf16, #tpu.memory_space<vmem>>, %arg3: memref<256x128xbf16, #tpu.memory_space<vmem>>) attributes {dimension_semantics = [#tpu.dimension_semantics<parallel>], iteration_bounds = array<i64: 2>, scalar_prefetch = 0 : i64, scratch_operands = 0 : i64, tpu.core_type = #tpu.core_type<tc>, window_params = [{transform_indices = @transform_0, window_bounds = array<i64: 256, 8>}, {pipeline_mode = #tpu.pipeline_mode<synchronous>, transform_indices = @transform_1, window_bounds = array<i64: 8, 128>}, {transform_indices = @transform_2, window_bounds = array<i64: 256, 128>}]} {
    %c0 = arith.constant 0 : index
    %c0_0 = arith.constant 0 : index
    %0 = vector.load %arg1[%c0, %c0_0] : memref<256x8xbf16, #tpu.memory_space<vmem>>, vector<256x8xbf16>
    %c0_1 = arith.constant 0 : index
    %c0_2 = arith.constant 0 : index
    %1 = vector.load %arg2[%c0_1, %c0_2] : memref<8x128xbf16, #tpu.memory_space<vmem>>, vector<8x128xbf16>
    %cst = arith.constant dense<0.000000e+00> : vector<256x128xf32>
    %2 = tpu.matmul %0, %1, %cst {dimension_numbers = #tpu.dot_dimension_numbers<[1], [0], [0], [1], [0, 0, 1, 1], [], []>} : vector<256x8xbf16>, vector<8x128xbf16>, vector<256x128xf32> -> vector<256x128xf32>
    %3 = arith.truncf %2 : vector<256x128xf32> to vector<256x128xbf16>
    %c0_3 = arith.constant 0 : index
    %c0_4 = arith.constant 0 : index
    %4 = vector.load %arg3[%c0_3, %c0_4] : memref<256x128xbf16, #tpu.memory_space<vmem>>, vector<256x128xbf16>
    tpu.vector_store %arg3[%c0_3, %c0_4], %3 {strides = array<i32>} : memref<256x128xbf16, #tpu.memory_space<vmem>>, vector<256x128xbf16>,
    return
  }
  func.func @transform_0(%arg0: i32) -> (i32, i32) {
    %c0_i32 = arith.constant 0 : i32
    %c0_i32_0 = arith.constant 0 : i32
    return %arg0, %c0_i32 : i32, i32
  }
  func.func @transform_1(%arg0: i32) -> (i32, i32) {
    %c0_i32 = arith.constant 0 : i32
    %c0_i32_0 = arith.constant 0 : i32
    %c0_i32_1 = arith.constant 0 : i32
    return %c0_i32, %c0_i32_0 : i32, i32
  }
  func.func @transform_2(%arg0: i32) -> (i32, i32) {
    %c0_i32 = arith.constant 0 : i32
    %c0_i32_0 = arith.constant 0 : i32
    return %arg0, %c0_i32 : i32, i32
  }
}

module attributes {stable_mosaic.version = 11 : i64} {
  func.func @_fuse_pred_kernel(%arg0: i32, %arg1: memref<256x128xbf16, #tpu.memory_space<vmem>>, %arg2: memref<256x128xbf16, #tpu.memory_space<vmem>>, %arg3: memref<256x128xbf16, #tpu.memory_space<vmem>>, %arg4: memref<256x128xbf16, #tpu.memory_space<vmem>>, %arg5: memref<1x128xf32, #tpu.memory_space<vmem>>, %arg6: memref<128x128xbf16, #tpu.memory_space<vmem>>, %arg7: memref<1x128xf32, #tpu.memory_space<vmem>>, %arg8: memref<256x128xf32, #tpu.memory_space<vmem>>) attributes {dimension_semantics = [#tpu.dimension_semantics<parallel>], iteration_bounds = array<i64: 2>, scalar_prefetch = 0 : i64, scratch_operands = 0 : i64, tpu.core_type = #tpu.core_type<tc>, window_params = [{transform_indices = @transform_0, window_bounds = array<i64: 256, 128>}, {transform_indices = @transform_1, window_bounds = array<i64: 256, 128>}, {transform_indices = @transform_2, window_bounds = array<i64: 256, 128>}, {transform_indices = @transform_3, window_bounds = array<i64: 256, 128>}, {pipeline_mode = #tpu.pipeline_mode<synchronous>, transform_indices = @transform_4, window_bounds = array<i64: 1, 128>}, {pipeline_mode = #tpu.pipeline_mode<synchronous>, transform_indices = @transform_5, window_bounds = array<i64: 128, 128>}, {pipeline_mode = #tpu.pipeline_mode<synchronous>, transform_indices = @transform_6, window_bounds = array<i64: 1, 128>}, {transform_indices = @transform_7, window_bounds = array<i64: 256, 128>}]} {
    %c0 = arith.constant 0 : index
    %c0_0 = arith.constant 0 : index
    %0 = vector.load %arg1[%c0, %c0_0] : memref<256x128xbf16, #tpu.memory_space<vmem>>, vector<256x128xbf16>
    %1 = arith.extf %0 : vector<256x128xbf16> to vector<256x128xf32>
    %c0_1 = arith.constant 0 : index
    %c0_2 = arith.constant 0 : index
    %2 = vector.load %arg2[%c0_1, %c0_2] : memref<256x128xbf16, #tpu.memory_space<vmem>>, vector<256x128xbf16>
    %3 = arith.extf %2 : vector<256x128xbf16> to vector<256x128xf32>
    %4 = arith.addf %1, %3 : vector<256x128xf32>
    %c0_3 = arith.constant 0 : index
    %c0_4 = arith.constant 0 : index
    %5 = vector.load %arg3[%c0_3, %c0_4] : memref<256x128xbf16, #tpu.memory_space<vmem>>, vector<256x128xbf16>
    %6 = arith.extf %5 : vector<256x128xbf16> to vector<256x128xf32>
    %7 = arith.addf %4, %6 : vector<256x128xf32>
    %c0_5 = arith.constant 0 : index
    %c0_6 = arith.constant 0 : index
    %8 = vector.load %arg4[%c0_5, %c0_6] : memref<256x128xbf16, #tpu.memory_space<vmem>>, vector<256x128xbf16>
    %9 = arith.extf %8 : vector<256x128xbf16> to vector<256x128xf32>
    %10 = arith.addf %7, %9 : vector<256x128xf32>
    %c0_7 = arith.constant 0 : index
    %c0_8 = arith.constant 0 : index
    %11 = vector.load %arg5[%c0_7, %c0_8] : memref<1x128xf32, #tpu.memory_space<vmem>>, vector<1x128xf32>
    %12 = vector.broadcast %11 : vector<1x128xf32> to vector<256x128xf32>
    %13 = arith.addf %10, %12 : vector<256x128xf32>
    %cst = arith.constant 0.000000e+00 : f32
    %14 = vector.broadcast %cst : f32 to vector<256x128xf32>
    %15 = arith.maximumf %13, %14 : vector<256x128xf32>
    %16 = arith.truncf %15 : vector<256x128xf32> to vector<256x128xbf16>
    %c0_9 = arith.constant 0 : index
    %c0_10 = arith.constant 0 : index
    %17 = vector.load %arg6[%c0_9, %c0_10] : memref<128x128xbf16, #tpu.memory_space<vmem>>, vector<128x128xbf16>
    %cst_11 = arith.constant dense<0.000000e+00> : vector<256x128xf32>
    %18 = tpu.matmul %16, %17, %cst_11 {dimension_numbers = #tpu.dot_dimension_numbers<[1], [0], [0], [1], [0, 0, 1, 1], [], []>} : vector<256x128xbf16>, vector<128x128xbf16>, vector<256x128xf32> -> vector<256x128xf32>
    %c0_12 = arith.constant 0 : index
    %c0_13 = arith.constant 0 : index
    %19 = vector.load %arg7[%c0_12, %c0_13] : memref<1x128xf32, #tpu.memory_space<vmem>>, vector<1x128xf32>
    %20 = vector.broadcast %19 : vector<1x128xf32> to vector<256x128xf32>
    %21 = arith.addf %18, %20 : vector<256x128xf32>
    %c0_14 = arith.constant 0 : index
    %c0_15 = arith.constant 0 : index
    %22 = vector.load %arg8[%c0_14, %c0_15] : memref<256x128xf32, #tpu.memory_space<vmem>>, vector<256x128xf32>
    tpu.vector_store %arg8[%c0_14, %c0_15], %21 {strides = array<i32>} : memref<256x128xf32, #tpu.memory_space<vmem>>, vector<256x128xf32>,
    return
  }
  func.func @transform_0(%arg0: i32) -> (i32, i32) {
    %c0_i32 = arith.constant 0 : i32
    %c0_i32_0 = arith.constant 0 : i32
    return %arg0, %c0_i32 : i32, i32
  }
  func.func @transform_1(%arg0: i32) -> (i32, i32) {
    %c0_i32 = arith.constant 0 : i32
    %c0_i32_0 = arith.constant 0 : i32
    return %arg0, %c0_i32 : i32, i32
  }
  func.func @transform_2(%arg0: i32) -> (i32, i32) {
    %c0_i32 = arith.constant 0 : i32
    %c0_i32_0 = arith.constant 0 : i32
    return %arg0, %c0_i32 : i32, i32
  }
  func.func @transform_3(%arg0: i32) -> (i32, i32) {
    %c0_i32 = arith.constant 0 : i32
    %c0_i32_0 = arith.constant 0 : i32
    return %arg0, %c0_i32 : i32, i32
  }
  func.func @transform_4(%arg0: i32) -> (i32, i32) {
    %c0_i32 = arith.constant 0 : i32
    %c0_i32_0 = arith.constant 0 : i32
    %c0_i32_1 = arith.constant 0 : i32
    return %c0_i32, %c0_i32_0 : i32, i32
  }
  func.func @transform_5(%arg0: i32) -> (i32, i32) {
    %c0_i32 = arith.constant 0 : i32
    %c0_i32_0 = arith.constant 0 : i32
    %c0_i32_1 = arith.constant 0 : i32
    return %c0_i32, %c0_i32_0 : i32, i32
  }
  func.func @transform_6(%arg0: i32) -> (i32, i32) {
    %c0_i32 = arith.constant 0 : i32
    %c0_i32_0 = arith.constant 0 : i32
    %c0_i32_1 = arith.constant 0 : i32
    return %c0_i32, %c0_i32_0 : i32, i32
  }
  func.func @transform_7(%arg0: i32) -> (i32, i32) {
    %c0_i32 = arith.constant 0 : i32
    %c0_i32_0 = arith.constant 0 : i32
    return %arg0, %c0_i32 : i32, i32
  }
}

</mosaic_0001>

<llo_original>
// kernel: segformer_head_forward.5
$region0: #{segformer_head_forward.5}
  #allocation0 [shape = 'u32[]', space=smem, size = 0x4, offset = 0x4, fixed_abs, tag = 'smem constant byte address 0x4 - core index']
  #allocation1 [shape = 'u32[144,128]{1,0:T(1,128)}', space=vmem, size = 0x12000, scoped, tag = 'internal scratch']
  %s0 = inlined_call_operand.vmem [shape: bf16[8,64], index: 0, kind: input, shape index: {}]
  %s1 = inlined_call_operand.vmem [shape: bf16[64,128], index: 1, kind: input, shape index: {}]
  %s2 = inlined_call_operand.vmem [shape: bf16[8,128], index: 2, kind: output, shape index: {}]
  %s3 = sld [smem:[#allocation0]]
  $region18: #{segformer_head_forward.5} parent=0
    _
  %s5 = ssub.s32 1, %s3
  %s6 = scalar_select 0, %s5, %s3
  // Predicated region
  $region2: #{segformer_head_forward.5} parent=0 // pred_check
    _
  $region3: #{segformer_head_forward.5} parent=0 // pred_check_branch
    %8 = sbr.rel (0) target = $region5
  $region4: #{segformer_head_forward.5} parent=0 // pred_region
    _
  $region5: #{segformer_head_forward.5} parent=0 // pred_fallthru
    _
  // Predicated region
  $region6: #{segformer_head_forward.5} parent=0 // pred_check
    _
  $region7: #{segformer_head_forward.5} parent=0 // pred_check_branch
    %10 = sbr.rel (0) target = $region9
  $region8: #{segformer_head_forward.5} parent=0 // pred_region
    _
  $region9: #{segformer_head_forward.5} parent=0 // pred_fallthru
    _
  %v12 = vld [vmem:[%s0] sm:$0xf]
  %v13 = vld [vmem:[%s1] sm:$0xf]
  %v14 = vld [vmem:[%s1 + $0x4] sm:$0xf]
  %v15 = vld [vmem:[%s1 + $0x8] sm:$0xf]
  %v16 = vld [vmem:[%s1 + $0xc] sm:$0xf]
  %v17 = vld [vmem:[%s1 + $0x10] sm:$0xf]
  %v18 = vld [vmem:[%s1 + $0x14] sm:$0xf]
  %v19 = vld [vmem:[%s1 + $0x18] sm:$0xf]
  %v20 = vld [vmem:[%s1 + $0x1c] sm:$0xf]
  %v29 = vunpack.c.l.b16 %v13
  %v30 = vunpack.c.l.b16 %v14
  %v31 = vunpack.c.l.b16 %v15
  %v32 = vunpack.c.l.b16 %v16
  %v33 = vunpack.c.l.b16 %v17
  %v34 = vunpack.c.l.b16 %v18
  %v35 = vunpack.c.l.b16 %v19
  %v36 = vunpack.c.l.b16 %v20
  %v37 = vpack.c.b16 %v30, %v29
  %v38 = vpack.c.b16 %v32, %v31
  %v39 = vpack.c.b16 %v34, %v33
  %v40 = vpack.c.b16 %v36, %v35
  %vm45 = vcmask 523264
  %v47 = vsel %vm45, %v12, 0
  %49 = vmatprep.subr.bf16.mxu0 0
  %50 = vmatpush1.bf16.msra.mxu0 %v37
  %51 = vmatprep.subr.bf16.mxu0 0
  %52 = vmatpush1.bf16.msra.mxu0 %v38
  %53 = vmatprep.subr.bf16.mxu0 0
  %54 = vmatpush1.bf16.msra.mxu0 %v39
  %55 = vmatprep.subr.bf16.mxu0 0
  %56 = vmatpush1.bf16.msra.mxu0 %v40
  %57 = vmatprep.subr.bf16.mxu0 0
  %58 = vmatpush1.bf16.msra.mxu0 0
  %59 = vmatprep.subr.bf16.mxu0 0
  %60 = vmatpush1.bf16.msra.mxu0 0
  %61 = vmatprep.subr.bf16.mxu0 0
  %62 = vmatpush1.bf16.msra.mxu0 0
  %63 = vmatprep.subr.bf16.mxu0 0
  %64 = vmatpush1.bf16.msra.mxu0 0
  %65 = vmatprep.subr.bf16.mxu0 0
  %66 = vmatpush1.bf16.msra.mxu0 0
  %67 = vmatprep.subr.bf16.mxu0 0
  %68 = vmatpush1.bf16.msra.mxu0 0
  %69 = vmatprep.subr.bf16.mxu0 0
  %70 = vmatpush1.bf16.msra.mxu0 0
  %71 = vmatprep.subr.bf16.mxu0 0
  %72 = vmatpush1.bf16.msra.mxu0 0
  %73 = vmatprep.subr.bf16.mxu0 0
  %74 = vmatpush1.bf16.msra.mxu0 0
  %75 = vmatprep.subr.bf16.mxu0 0
  %76 = vmatpush1.bf16.msra.mxu0 0
  %77 = vmatprep.subr.bf16.mxu0 0
  %78 = vmatpush1.bf16.msra.mxu0 0
  %79 = vmatprep.subr.bf16.mxu0 0
  %80 = vmatpush1.bf16.msra.mxu0 0
  %81 = vmatprep.mubr.bf16.mxu0 0
  %82 = vmatmul.mubr.bf16.gmra.mrb[0].mxu0 %v47
  %v83 = vpop.f32.mrb[0].mxu0
  %v84 = vadd.f32 0.0, %v83
  %v85 = vpop.f32.mrb[0].mxu0
  %v86 = vpop.f32.mrb[0].mxu0
  %v87 = vpop.f32.mrb[0].mxu0
  %88 = vdwg.mxu0
  %v89 = vpack.c.bf16 %v84, %v84
  %90 = vst [vmem:[%s2] sm:$0xf] %v89
  // Predicated region
  $region10: #{segformer_head_forward.5} parent=0 // pred_check
    _
  $region11: #{segformer_head_forward.5} parent=0 // pred_check_branch
    %92 = sbr.rel (0) target = $region13
  $region12: #{segformer_head_forward.5} parent=0 // pred_region
    _
  $region13: #{segformer_head_forward.5} parent=0 // pred_fallthru
    _
  // Predicated region
  $region14: #{segformer_head_forward.5} parent=0 // pred_check
    _
  $region15: #{segformer_head_forward.5} parent=0 // pred_check_branch
    %94 = sbr.rel (0) target = $region17
  $region16: #{segformer_head_forward.5} parent=0 // pred_region
    _
  $region17: #{segformer_head_forward.5} parent=0 // pred_fallthru
    _

// kernel: segformer_head_forward.6
$region0: #{segformer_head_forward.6}
  #allocation0 [shape = 'u32[]', space=smem, size = 0x4, offset = 0x4, fixed_abs, tag = 'smem constant byte address 0x4 - core index']
  #allocation1 [shape = 'u32[144,128]{1,0:T(1,128)}', space=vmem, size = 0x12000, scoped, tag = 'internal scratch']
  %s0 = inlined_call_operand.vmem [shape: bf16[32,32], index: 0, kind: input, shape index: {}]
  %s1 = inlined_call_operand.vmem [shape: bf16[32,128], index: 1, kind: input, shape index: {}]
  %s2 = inlined_call_operand.vmem [shape: bf16[32,128], index: 2, kind: output, shape index: {}]
  %s3 = sld [smem:[#allocation0]]
  $region41: #{segformer_head_forward.6} parent=0
    _
  %s5 = ssub.s32 1, %s3
  %s6 = scalar_select 0, %s5, %s3
  loop: start=0, step=1, limit=4
  $region2: #{segformer_head_forward.6} parent=0 // loop_pre_header
    _
  $region3: #{segformer_head_forward.6} parent=0 // loop_header
    %s8 = sphi 0, %s12
    %p9 = scmp.ge.s32.totalorder %s8, 4
    %s18 = sphi 0, %s20
    %s21 = sphi 0, %s18
    %s22 = sphi 0, %s21
    %s38 = sphi 0, %s22
    %s42 = sphi 0, %s42
    %s44 = sphi 0, %s42
    %s45 = sphi 0, %s44
    %s59 = sphi 0, %s45
    %s65 = sphi 0, %s67
    %s68 = sphi 0, %s65
    %s69 = sphi 0, %s68
    %s85 = sphi 0, %s69
  $region4: #{segformer_head_forward.6} parent=0 // loop_header_branch
    %11 = sbr.rel (%p9) target = $region8
  $region5: #{segformer_head_forward.6} parent=0 // loop_body
    %s13 = ssub.s32 %s8, 1
    %s14 = ssub.s32 %s8, 2
    %s15 = sadd.s32 %s8, 1
    %s16 = ssub.s32 %s8, %s15
    %p17 = scmp.eq.s32.totalorder %s16, 0
    %s19 = sadd.s32 %s18, 1
    %s20 = scalar_select %p17, %s18, %s19
    %p23 = pneg %p17
    %p24 = scmp.eq.s32.totalorder %s8, 1
    %p25 = por %p23, %p24
    %p26 = scmp.ne.s32.totalorder %s18, %s21
    %p27 = scmp.eq.s32.totalorder %s8, 0
    %p28 = por %p26, %p27
    %p29 = scmp.ne.s32.totalorder %s18, %s21
    %p30 = scmp.eq.s32.totalorder %s13, 1
    %p31 = por %p29, %p30
    %p32 = scmp.ne.s32.totalorder %s21, %s22
    %p33 = scmp.eq.s32.totalorder %s13, 0
    %p34 = por %p32, %p33
    %p35 = scmp.ne.s32.totalorder %s21, %s22
    %p36 = scmp.eq.s32.totalorder %s14, 1
    %p37 = por %p35, %p36
    %p39 = scmp.ne.s32.totalorder %s22, %s38
    %p40 = scmp.eq.s32.totalorder %s14, 0
    %p41 = por %p39, %p40
    %s43 = sadd.s32 %s42, 1
    %p46 = scmp.eq.s32.totalorder %s8, 1
    %p47 = scmp.ne.s32.totalorder %s42, %s44
    %p48 = scmp.eq.s32.totalorder %s8, 0
    %p49 = por %p47, %p48
    %p50 = scmp.ne.s32.totalorder %s42, %s44
    %p51 = scmp.eq.s32.totalorder %s13, 1
    %p52 = por %p50, %p51
    %p53 = scmp.ne.s32.totalorder %s44, %s45
    %p54 = scmp.eq.s32.totalorder %s13, 0
    %p55 = por %p53, %p54
    %p56 = scmp.ne.s32.totalorder %s44, %s45
    %p57 = scmp.eq.s32.totalorder %s14, 1
    %p58 = por %p56, %p57
    %p60 = scmp.ne.s32.totalorder %s45, %s59
    %p61 = scmp.eq.s32.totalorder %s14, 0
    %p62 = por %p60, %p61
    %s63 = ssub.s32 %s8, %s15
    %p64 = scmp.eq.s32.totalorder %s63, 0
    %s66 = sadd.s32 %s65, 1
    %s67 = scalar_select %p64, %s65, %s66
    %p70 = pneg %p64
    %p71 = scmp.eq.s32.totalorder %s8, 1
    %p72 = por %p70, %p71
    %p73 = scmp.ne.s32.totalorder %s65, %s68
    %p74 = scmp.eq.s32.totalorder %s8, 0
    %p75 = por %p73, %p74
    %p76 = scmp.ne.s32.totalorder %s65, %s68
    %p77 = scmp.eq.s32.totalorder %s13, 1
    %p78 = por %p76, %p77
    %p79 = scmp.ne.s32.totalorder %s68, %s69
    %p80 = scmp.eq.s32.totalorder %s13, 0
    %p81 = por %p79, %p80
    %p82 = scmp.ne.s32.totalorder %s68, %s69
    %p83 = scmp.eq.s32.totalorder %s14, 1
    %p84 = por %p82, %p83
    %p86 = scmp.ne.s32.totalorder %s69, %s85
    %p87 = scmp.eq.s32.totalorder %s14, 0
    %p88 = por %p86, %p87
    %p89 = scmp.le.s32.totalorder 1, %s8
    %p90 = scmp.lt.s32.totalorder %s8, 3
    %p91 = pnand %p89, %p90
    %p92 = pneg %p91
    // Predicated region
    $region9: #{segformer_head_forward.6} parent=5 // pred_check
      _
    $region10: #{segformer_head_forward.6} parent=5 // pred_check_branch
      %94 = sbr.rel (%p91) target = $region12
    $region11: #{segformer_head_forward.6} parent=5 // pred_region
      %s95 = ssub.s32 %s8, 1
      // Predicated region
      $region13: #{segformer_head_forward.6} parent=11 // pred_check
        %p96 = pneg %p55
      $region14: #{segformer_head_forward.6} parent=11 // pred_check_branch
        %98 = sbr.rel (%p96) target = $region16
      $region15: #{segformer_head_forward.6} parent=11 // pred_region
        _
      $region16: #{segformer_head_forward.6} parent=11 // pred_fallthru
        _
    $region12: #{segformer_head_forward.6} parent=5 // pred_fallthru
      _
    %p99 = scmp.lt.s32.totalorder %s8, 2
    // Predicated region
    $region17: #{segformer_head_forward.6} parent=5 // pred_check
      %p100 = pneg %p99
    $region18: #{segformer_head_forward.6} parent=5 // pred_check_branch
      %102 = sbr.rel (%p100) target = $region20
    $region19: #{segformer_head_forward.6} parent=5 // pred_region
      // Predicated region
      $region21: #{segformer_head_forward.6} parent=19 // pred_check
        %p103 = pneg %p28
      $region22: #{segformer_head_forward.6} parent=19 // pred_check_branch
        %105 = sbr.rel (%p103) target = $region24
      $region23: #{segformer_head_forward.6} parent=19 // pred_region
        %s106 = smul.u32 2, %s8
        %p107 = scmp.lt.s32.totalorder %s106, 3
        %s108 = scalar_select %p107, %s106, 3
        %s109 = smul.addr %s108, 4
        %s110 = scalar_lea.vmem %s0, %s109
        %s111 = smul.u32 2, %s8
      $region24: #{segformer_head_forward.6} parent=19 // pred_fallthru
        _
    $region20: #{segformer_head_forward.6} parent=5 // pred_fallthru
      _
    %p112 = scmp.le.s32.totalorder 1, %s8
    %p113 = scmp.lt.s32.totalorder %s8, 3
    %p114 = pnand %p112, %p113
    %p115 = pneg %p114
    // Predicated region
    $region25: #{segformer_head_forward.6} parent=5 // pred_check
      _
    $region26: #{segformer_head_forward.6} parent=5 // pred_check_branch
      %117 = sbr.rel (%p114) target = $region28
    $region27: #{segformer_head_forward.6} parent=5 // pred_region
      %s118 = ssub.s32 %s8, 1
      %s119 = smul.u32 2, %s13
      %p120 = scmp.lt.s32.totalorder %s119, 3
      %s121 = scalar_select %p120, %s119, 3
      %s122 = smul.addr %s121, 4
      %s123 = scalar_lea.vmem %s0, %s122
      %p124 = pneg %p34
      %p125 = pneg %p31
      %p126 = pneg %p55
      %p127 = pneg %p52
      %p128 = pneg %p81
      %p129 = pneg %p78
      %s130 = smul.u32 2, %s13
      %p131 = scmp.lt.s32.totalorder %s130, 3
      %s132 = scalar_select %p131, %s130, 3
      %s133 = smul.addr %s132, 4
      %s134 = scalar_lea.vmem %s2, %s133
      %s135 = smul.u32 2, %s13
      %p136 = scmp.lt.s32.totalorder %s135, 3
      %s137 = scalar_select %p136, %s135, 3
      %s138 = smul.addr %s137, 4
      %s139 = scalar_lea.vmem %s0, %s138
      %s140 = smul.u32 2, %s13
      %s141 = smul.u32 2, %s13
      %p142 = scmp.lt.s32.totalorder %s141, 3
      %s143 = scalar_select %p142, %s141, 3
      %s144 = smul.addr %s143, 4
      %s145 = scalar_lea.vmem %s2, %s144
      %s146 = smul.u32 2, %s13
      %v148 = vld [vmem:[%s139] sm:$0xf]
      %v149 = vld [vmem:[%s139 + $0x4] sm:$0xf]
      %v150 = vld [vmem:[%s1] sm:$0xf]
      %v151 = vld [vmem:[%s1 + $0x4] sm:$0xf]
      %v152 = vld [vmem:[%s1 + $0x8] sm:$0xf]
      %v153 = vld [vmem:[%s1 + $0xc] sm:$0xf]
      %v156 = vunpack.c.l.b16 %v148
      %v157 = vunpack.c.l.b16 %v149
      %v158 = vpack.c.b16 %v157, %v156
      %v163 = vunpack.c.l.b16 %v150
      %v164 = vunpack.c.l.b16 %v151
      %v165 = vunpack.c.l.b16 %v152
      %v166 = vunpack.c.l.b16 %v153
      %v167 = vpack.c.b16 %v164, %v163
      %v168 = vpack.c.b16 %v166, %v165
      %vm171 = vcmask 261120
      %v173 = vsel %vm171, %v158, 0
      %175 = vmatprep.subr.bf16.mxu0 0
      %176 = vmatpush1.bf16.msra.mxu0 %v167
      %177 = vmatprep.subr.bf16.mxu0 0
      %178 = vmatpush1.bf16.msra.mxu0 %v168
      %179 = vmatprep.subr.bf16.mxu0 0
      %180 = vmatpush1.bf16.msra.mxu0 0
      %181 = vmatprep.subr.bf16.mxu0 0
      %182 = vmatpush1.bf16.msra.mxu0 0
      %183 = vmatprep.subr.bf16.mxu0 0
      %184 = vmatpush1.bf16.msra.mxu0 0
      %185 = vmatprep.subr.bf16.mxu0 0
      %186 = vmatpush1.bf16.msra.mxu0 0
      %187 = vmatprep.subr.bf16.mxu0 0
      %188 = vmatpush1.bf16.msra.mxu0 0
      %189 = vmatprep.subr.bf16.mxu0 0
      %190 = vmatpush1.bf16.msra.mxu0 0
      %191 = vmatprep.subr.bf16.mxu0 0
      %192 = vmatpush1.bf16.msra.mxu0 0
      %193 = vmatprep.subr.bf16.mxu0 0
      %194 = vmatpush1.bf16.msra.mxu0 0
      %195 = vmatprep.subr.bf16.mxu0 0
      %196 = vmatpush1.bf16.msra.mxu0 0
      %197 = vmatprep.subr.bf16.mxu0 0
      %198 = vmatpush1.bf16.msra.mxu0 0
      %199 = vmatprep.subr.bf16.mxu0 0
      %200 = vmatpush1.bf16.msra.mxu0 0
      %201 = vmatprep.subr.bf16.mxu0 0
      %202 = vmatpush1.bf16.msra.mxu0 0
      %203 = vmatprep.subr.bf16.mxu0 0
      %204 = vmatpush1.bf16.msra.mxu0 0
      %205 = vmatprep.subr.bf16.mxu0 0
      %206 = vmatpush1.bf16.msra.mxu0 0
      %207 = vmatprep.mubr.bf16.mxu0 0
      %208 = vmatmul.mubr.bf16.gmra.mrb[0].mxu0 %v173
      %v209 = vpop.f32.mrb[0].mxu0
      %v210 = vadd.f32 0.0, %v209
      %v211 = vpop.f32.mrb[0].mxu0
      %v212 = vpop.f32.mrb[0].mxu0
      %v213 = vadd.f32 0.0, %v212
      %v214 = vpop.f32.mrb[0].mxu0
      %215 = vdwg.mxu0
      %v216 = vpack.c.bf16 %v213, %v210
      %v218 = vunpack.c.l.b16 %v216
      %v219 = vunpack.c.h.b16 %v216
      %v220 = vpack.c.b16 %v218, %v218
      %v221 = vpack.c.b16 %v219, %v219
      %224 = vst [vmem:[%s145] sm:$0xf] %v220
      %225 = vst [vmem:[%s145 + $0x4] sm:$0xf] %v221
      %s226 = smul.u32 2, %s13
      %p227 = scmp.lt.s32.totalorder %s226, 3
      %s228 = scalar_select %p227, %s226, 3
      %s229 = smul.addr %s228, 4
      %s230 = scalar_lea.vmem %s2, %s229
      // Predicated region
      $region29: #{segformer_head_forward.6} parent=27 // pred_check
        %p231 = pneg %p78
      $region30: #{segformer_head_forward.6} parent=27 // pred_check_branch
        %233 = sbr.rel (%p231) target = $region32
      $region31: #{segformer_head_forward.6} parent=27 // pred_region
        %s234 = smul.u32 2, %s13
      $region32: #{segformer_head_forward.6} parent=27 // pred_fallthru
        _
    $region28: #{segformer_head_forward.6} parent=5 // pred_fallthru
      _
    %p235 = scmp.le.s32.totalorder 2, %s8
    // Predicated region
    $region33: #{segformer_head_forward.6} parent=5 // pred_check
      %p236 = pneg %p235
    $region34: #{segformer_head_forward.6} parent=5 // pred_check_branch
      %238 = sbr.rel (%p236) target = $region36
    $region35: #{segformer_head_forward.6} parent=5 // pred_region
      %s239 = ssub.s32 %s8, 2
      // Predicated region
      $region37: #{segformer_head_forward.6} parent=35 // pred_check
        %p240 = pneg %p84
      $region38: #{segformer_head_forward.6} parent=35 // pred_check_branch
        %242 = sbr.rel (%p240) target = $region40
      $region39: #{segformer_head_forward.6} parent=35 // pred_region
        %s243 = smul.u32 2, %s14
        %p244 = scmp.lt.s32.totalorder %s243, 3
        %s245 = scalar_select %p244, %s243, 3
        %s246 = smul.addr %s245, 4
        %s247 = scalar_lea.vmem %s2, %s246
      $region40: #{segformer_head_forward.6} parent=35 // pred_fallthru
        _
    $region36: #{segformer_head_forward.6} parent=5 // pred_fallthru
      _
  $region6: #{segformer_head_forward.6} parent=0 // loop_footer
    %s12 = sadd.s32 1, %s8
  $region7: #{segformer_head_forward.6} parent=0 // loop_footer_branch
    %7 = sbr.rel target = $region3
  $region8: #{segformer_head_forward.6} parent=0 // loop_exit
    _

// kernel: segformer_head_forward.7
$region0: #{segformer_head_forward.7}
  #allocation0 [shape = 'u32[]', space=smem, size = 0x4, offset = 0x4, fixed_abs, tag = 'smem constant byte address 0x4 - core index']
  #allocation1 [shape = 'u32[144,128]{1,0:T(1,128)}', space=vmem, size = 0x12000, scoped, tag = 'internal scratch']
  %s0 = inlined_call_operand.vmem [shape: bf16[128,16], index: 0, kind: input, shape index: {}]
  %s1 = inlined_call_operand.vmem [shape: bf16[16,128], index: 1, kind: input, shape index: {}]
  %s2 = inlined_call_operand.vmem [shape: bf16[128,128], index: 2, kind: output, shape index: {}]
  %s3 = sld [smem:[#allocation0]]
  $region41: #{segformer_head_forward.7} parent=0
    _
  %s5 = ssub.s32 1, %s3
  %s6 = scalar_select 0, %s5, %s3
  loop: start=0, step=1, limit=4
  $region2: #{segformer_head_forward.7} parent=0 // loop_pre_header
    _
  $region3: #{segformer_head_forward.7} parent=0 // loop_header
    %s8 = sphi 0, %s12
    %p9 = scmp.ge.s32.totalorder %s8, 4
    %s18 = sphi 0, %s20
    %s21 = sphi 0, %s18
    %s22 = sphi 0, %s21
    %s38 = sphi 0, %s22
    %s42 = sphi 0, %s42
    %s44 = sphi 0, %s42
    %s45 = sphi 0, %s44
    %s59 = sphi 0, %s45
    %s65 = sphi 0, %s67
    %s68 = sphi 0, %s65
    %s69 = sphi 0, %s68
    %s85 = sphi 0, %s69
  $region4: #{segformer_head_forward.7} parent=0 // loop_header_branch
    %11 = sbr.rel (%p9) target = $region8
  $region5: #{segformer_head_forward.7} parent=0 // loop_body
    %s13 = ssub.s32 %s8, 1
    %s14 = ssub.s32 %s8, 2
    %s15 = sadd.s32 %s8, 1
    %s16 = ssub.s32 %s8, %s15
    %p17 = scmp.eq.s32.totalorder %s16, 0
    %s19 = sadd.s32 %s18, 1
    %s20 = scalar_select %p17, %s18, %s19
    %p23 = pneg %p17
    %p24 = scmp.eq.s32.totalorder %s8, 1
    %p25 = por %p23, %p24
    %p26 = scmp.ne.s32.totalorder %s18, %s21
    %p27 = scmp.eq.s32.totalorder %s8, 0
    %p28 = por %p26, %p27
    %p29 = scmp.ne.s32.totalorder %s18, %s21
    %p30 = scmp.eq.s32.totalorder %s13, 1
    %p31 = por %p29, %p30
    %p32 = scmp.ne.s32.totalorder %s21, %s22
    %p33 = scmp.eq.s32.totalorder %s13, 0
    %p34 = por %p32, %p33
    %p35 = scmp.ne.s32.totalorder %s21, %s22
    %p36 = scmp.eq.s32.totalorder %s14, 1
    %p37 = por %p35, %p36
    %p39 = scmp.ne.s32.totalorder %s22, %s38
    %p40 = scmp.eq.s32.totalorder %s14, 0
    %p41 = por %p39, %p40
    %s43 = sadd.s32 %s42, 1
    %p46 = scmp.eq.s32.totalorder %s8, 1
    %p47 = scmp.ne.s32.totalorder %s42, %s44
    %p48 = scmp.eq.s32.totalorder %s8, 0
    %p49 = por %p47, %p48
    %p50 = scmp.ne.s32.totalorder %s42, %s44
    %p51 = scmp.eq.s32.totalorder %s13, 1
    %p52 = por %p50, %p51
    %p53 = scmp.ne.s32.totalorder %s44, %s45
    %p54 = scmp.eq.s32.totalorder %s13, 0
    %p55 = por %p53, %p54
    %p56 = scmp.ne.s32.totalorder %s44, %s45
    %p57 = scmp.eq.s32.totalorder %s14, 1
    %p58 = por %p56, %p57
    %p60 = scmp.ne.s32.totalorder %s45, %s59
    %p61 = scmp.eq.s32.totalorder %s14, 0
    %p62 = por %p60, %p61
    %s63 = ssub.s32 %s8, %s15
    %p64 = scmp.eq.s32.totalorder %s63, 0
    %s66 = sadd.s32 %s65, 1
    %s67 = scalar_select %p64, %s65, %s66
    %p70 = pneg %p64
    %p71 = scmp.eq.s32.totalorder %s8, 1
    %p72 = por %p70, %p71
    %p73 = scmp.ne.s32.totalorder %s65, %s68
    %p74 = scmp.eq.s32.totalorder %s8, 0
    %p75 = por %p73, %p74
    %p76 = scmp.ne.s32.totalorder %s65, %s68
    %p77 = scmp.eq.s32.totalorder %s13, 1
    %p78 = por %p76, %p77
    %p79 = scmp.ne.s32.totalorder %s68, %s69
    %p80 = scmp.eq.s32.totalorder %s13, 0
    %p81 = por %p79, %p80
    %p82 = scmp.ne.s32.totalorder %s68, %s69
    %p83 = scmp.eq.s32.totalorder %s14, 1
    %p84 = por %p82, %p83
    %p86 = scmp.ne.s32.totalorder %s69, %s85
    %p87 = scmp.eq.s32.totalorder %s14, 0
    %p88 = por %p86, %p87
    %p89 = scmp.le.s32.totalorder 1, %s8
    %p90 = scmp.lt.s32.totalorder %s8, 3
    %p91 = pnand %p89, %p90
    %p92 = pneg %p91
    // Predicated region
    $region9: #{segformer_head_forward.7} parent=5 // pred_check
      _
    $region10: #{segformer_head_forward.7} parent=5 // pred_check_branch
      %94 = sbr.rel (%p91) target = $region12
    $region11: #{segformer_head_forward.7} parent=5 // pred_region
      %s95 = ssub.s32 %s8, 1
      // Predicated region
      $region13: #{segformer_head_forward.7} parent=11 // pred_check
        %p96 = pneg %p55
      $region14: #{segformer_head_forward.7} parent=11 // pred_check_branch
        %98 = sbr.rel (%p96) target = $region16
      $region15: #{segformer_head_forward.7} parent=11 // pred_region
        _
      $region16: #{segformer_head_forward.7} parent=11 // pred_fallthru
        _
    $region12: #{segformer_head_forward.7} parent=5 // pred_fallthru
      _
    %p99 = scmp.lt.s32.totalorder %s8, 2
    // Predicated region
    $region17: #{segformer_head_forward.7} parent=5 // pred_check
      %p100 = pneg %p99
    $region18: #{segformer_head_forward.7} parent=5 // pred_check_branch
      %102 = sbr.rel (%p100) target = $region20
    $region19: #{segformer_head_forward.7} parent=5 // pred_region
      // Predicated region
      $region21: #{segformer_head_forward.7} parent=19 // pred_check
        %p103 = pneg %p28
      $region22: #{segformer_head_forward.7} parent=19 // pred_check_branch
        %105 = sbr.rel (%p103) target = $region24
      $region23: #{segformer_head_forward.7} parent=19 // pred_region
        %s106 = smul.u32 8, %s8
        %p107 = scmp.lt.s32.totalorder %s106, 15
        %s108 = scalar_select %p107, %s106, 15
        %s109 = smul.addr %s108, 4
        %s110 = scalar_lea.vmem %s0, %s109
        %s111 = smul.u32 8, %s8
      $region24: #{segformer_head_forward.7} parent=19 // pred_fallthru
        _
    $region20: #{segformer_head_forward.7} parent=5 // pred_fallthru
      _
    %p112 = scmp.le.s32.totalorder 1, %s8
    %p113 = scmp.lt.s32.totalorder %s8, 3
    %p114 = pnand %p112, %p113
    %p115 = pneg %p114
    // Predicated region
    $region25: #{segformer_head_forward.7} parent=5 // pred_check
      _
    $region26: #{segformer_head_forward.7} parent=5 // pred_check_branch
      %117 = sbr.rel (%p114) target = $region28
    $region27: #{segformer_head_forward.7} parent=5 // pred_region
      %s118 = ssub.s32 %s8, 1
      %s119 = smul.u32 8, %s13
      %p120 = scmp.lt.s32.totalorder %s119, 15
      %s121 = scalar_select %p120, %s119, 15
      %s122 = smul.addr %s121, 4
      %s123 = scalar_lea.vmem %s0, %s122
      %p124 = pneg %p34
      %p125 = pneg %p31
      %p126 = pneg %p55
      %p127 = pneg %p52
      %p128 = pneg %p81
      %p129 = pneg %p78
      %s130 = smul.u32 8, %s13
      %p131 = scmp.lt.s32.totalorder %s130, 15
      %s132 = scalar_select %p131, %s130, 15
      %s133 = smul.addr %s132, 4
      %s134 = scalar_lea.vmem %s2, %s133
      %s135 = smul.u32 8, %s13
      %p136 = scmp.lt.s32.totalorder %s135, 15
      %s137 = scalar_select %p136, %s135, 15
      %s138 = smul.addr %s137, 4
      %s139 = scalar_lea.vmem %s0, %s138
      %s140 = smul.u32 8, %s13
      %s141 = smul.u32 8, %s13
      %p142 = scmp.lt.s32.totalorder %s141, 15
      %s143 = scalar_select %p142, %s141, 15
      %s144 = smul.addr %s143, 4
      %s145 = scalar_lea.vmem %s2, %s144
      %s146 = smul.u32 8, %s13
      %v148 = vld [vmem:[%s139] sm:$0xf]
      %v149 = vld [vmem:[%s139 + $0x4] sm:$0xf]
      %v150 = vld [vmem:[%s139 + $0x8] sm:$0xf]
      %v151 = vld [vmem:[%s139 + $0xc] sm:$0xf]
      %v152 = vld [vmem:[%s139 + $0x10] sm:$0xf]
      %v153 = vld [vmem:[%s139 + $0x14] sm:$0xf]
      %v154 = vld [vmem:[%s139 + $0x18] sm:$0xf]
      %v155 = vld [vmem:[%s139 + $0x1c] sm:$0xf]
      %v156 = vld [vmem:[%s1] sm:$0xf]
      %v157 = vld [vmem:[%s1 + $0x4] sm:$0xf]
      %v166 = vunpack.c.l.b16 %v148
      %v167 = vunpack.c.l.b16 %v149
      %v168 = vunpack.c.l.b16 %v150
      %v169 = vunpack.c.l.b16 %v151
      %v170 = vunpack.c.l.b16 %v152
      %v171 = vunpack.c.l.b16 %v153
      %v172 = vunpack.c.l.b16 %v154
      %v173 = vunpack.c.l.b16 %v155
      %v174 = vpack.c.b16 %v167, %v166
      %v175 = vpack.c.b16 %v169, %v168
      %v176 = vpack.c.b16 %v171, %v170
      %v177 = vpack.c.b16 %v173, %v172
      %v180 = vunpack.c.l.b16 %v156
      %v181 = vunpack.c.l.b16 %v157
      %v182 = vpack.c.b16 %v181, %v180
      %vm184 = vcmask 130048
      %v186 = vsel %vm184, %v174, 0
      %v189 = vsel %vm184, %v175, 0
      %v192 = vsel %vm184, %v176, 0
      %v195 = vsel %vm184, %v177, 0
      %197 = vmatprep.subr.bf16.mxu0 0
      %198 = vmatpush1.bf16.msra.mxu0 %v182
      %199 = vmatprep.subr.bf16.mxu0 0
      %200 = vmatpush1.bf16.msra.mxu0 0
      %201 = vmatprep.subr.bf16.mxu0 0
      %202 = vmatpush1.bf16.msra.mxu0 0
      %203 = vmatprep.subr.bf16.mxu0 0
      %204 = vmatpush1.bf16.msra.mxu0 0
      %205 = vmatprep.subr.bf16.mxu0 0
      %206 = vmatpush1.bf16.msra.mxu0 0
      %207 = vmatprep.subr.bf16.mxu0 0
      %208 = vmatpush1.bf16.msra.mxu0 0
      %209 = vmatprep.subr.bf16.mxu0 0
      %210 = vmatpush1.bf16.msra.mxu0 0
      %211 = vmatprep.subr.bf16.mxu0 0
      %212 = vmatpush1.bf16.msra.mxu0 0
      %213 = vmatprep.subr.bf16.mxu0 0
      %214 = vmatpush1.bf16.msra.mxu0 0
      %215 = vmatprep.subr.bf16.mxu0 0
      %216 = vmatpush1.bf16.msra.mxu0 0
      %217 = vmatprep.subr.bf16.mxu0 0
      %218 = vmatpush1.bf16.msra.mxu0 0
      %219 = vmatprep.subr.bf16.mxu0 0
      %220 = vmatpush1.bf16.msra.mxu0 0
      %221 = vmatprep.subr.bf16.mxu0 0
      %222 = vmatpush1.bf16.msra.mxu0 0
      %223 = vmatprep.subr.bf16.mxu0 0
      %224 = vmatpush1.bf16.msra.mxu0 0
      %225 = vmatprep.subr.bf16.mxu0 0
      %226 = vmatpush1.bf16.msra.mxu0 0
      %227 = vmatprep.subr.bf16.mxu0 0
      %228 = vmatpush1.bf16.msra.mxu0 0
      %229 = vmatprep.mubr.bf16.mxu0 0
      %230 = vmatmul.mubr.bf16.gmra.mrb[0].mxu0 %v186
      %v231 = vpop.f32.mrb[0].mxu0
      %v232 = vadd.f32 0.0, %v231
      %v233 = vpop.f32.mrb[0].mxu0
      %v234 = vpop.f32.mrb[0].mxu0
      %v235 = vadd.f32 0.0, %v234
      %v236 = vpop.f32.mrb[0].mxu0
      %237 = vmatprep.mubr.bf16.mxu0 0
      %238 = vmatmul.mubr.bf16.gmra.mrb[0].mxu0 %v189
      %v239 = vpop.f32.mrb[0].mxu0
      %v240 = vadd.f32 0.0, %v239
      %v241 = vpop.f32.mrb[0].mxu0
      %v242 = vpop.f32.mrb[0].mxu0
      %v243 = vadd.f32 0.0, %v242
      %v244 = vpop.f32.mrb[0].mxu0
      %245 = vmatprep.mubr.bf16.mxu0 0
      %246 = vmatmul.mubr.bf16.gmra.mrb[0].mxu0 %v192
      %v247 = vpop.f32.mrb[0].mxu0
      %v248 = vadd.f32 0.0, %v247
      %v249 = vpop.f32.mrb[0].mxu0
      %v250 = vpop.f32.mrb[0].mxu0
      %v251 = vadd.f32 0.0, %v250
      %v252 = vpop.f32.mrb[0].mxu0
      %253 = vmatprep.mubr.bf16.mxu0 0
      %254 = vmatmul.mubr.bf16.gmra.mrb[0].mxu0 %v195
      %v255 = vpop.f32.mrb[0].mxu0
      %v256 = vadd.f32 0.0, %v255
      %v257 = vpop.f32.mrb[0].mxu0
      %v258 = vpop.f32.mrb[0].mxu0
      %v259 = vadd.f32 0.0, %v258
      %v260 = vpop.f32.mrb[0].mxu0
      %261 = vdwg.mxu0
      %v262 = vpack.c.bf16 %v235, %v232
      %v263 = vpack.c.bf16 %v243, %v240
      %v264 = vpack.c.bf16 %v251, %v248
      %v265 = vpack.c.bf16 %v259, %v256
      %v270 = vunpack.c.l.b16 %v262
      %v271 = vunpack.c.h.b16 %v262
      %v272 = vunpack.c.l.b16 %v263
      %v273 = vunpack.c.h.b16 %v263
      %v274 = vunpack.c.l.b16 %v264
      %v275 = vunpack.c.h.b16 %v264
      %v276 = vunpack.c.l.b16 %v265
      %v277 = vunpack.c.h.b16 %v265
      %v278 = vpack.c.b16 %v270, %v270
      %v279 = vpack.c.b16 %v271, %v271
      %v280 = vpack.c.b16 %v272, %v272
      %v281 = vpack.c.b16 %v273, %v273
      %v282 = vpack.c.b16 %v274, %v274
      %v283 = vpack.c.b16 %v275, %v275
      %v284 = vpack.c.b16 %v276, %v276
      %v285 = vpack.c.b16 %v277, %v277
      %294 = vst [vmem:[%s145] sm:$0xf] %v278
      %295 = vst [vmem:[%s145 + $0x4] sm:$0xf] %v279
      %296 = vst [vmem:[%s145 + $0x8] sm:$0xf] %v280
      %297 = vst [vmem:[%s145 + $0xc] sm:$0xf] %v281
      %298 = vst [vmem:[%s145 + $0x10] sm:$0xf] %v282
      %299 = vst [vmem:[%s145 + $0x14] sm:$0xf] %v283
      %300 = vst [vmem:[%s145 + $0x18] sm:$0xf] %v284
      %301 = vst [vmem:[%s145 + $0x1c] sm:$0xf] %v285
      %s302 = smul.u32 8, %s13
      %p303 = scmp.lt.s32.totalorder %s302, 15
      %s304 = scalar_select %p303, %s302, 15
      %s305 = smul.addr %s304, 4
      %s306 = scalar_lea.vmem %s2, %s305
      // Predicated region
      $region29: #{segformer_head_forward.7} parent=27 // pred_check
        %p307 = pneg %p78
      $region30: #{segformer_head_forward.7} parent=27 // pred_check_branch
        %309 = sbr.rel (%p307) target = $region32
      $region31: #{segformer_head_forward.7} parent=27 // pred_region
        %s310 = smul.u32 8, %s13
      $region32: #{segformer_head_forward.7} parent=27 // pred_fallthru
        _
    $region28: #{segformer_head_forward.7} parent=5 // pred_fallthru
      _
    %p311 = scmp.le.s32.totalorder 2, %s8
    // Predicated region
    $region33: #{segformer_head_forward.7} parent=5 // pred_check
      %p312 = pneg %p311
    $region34: #{segformer_head_forward.7} parent=5 // pred_check_branch
      %314 = sbr.rel (%p312) target = $region36
    $region35: #{segformer_head_forward.7} parent=5 // pred_region
      %s315 = ssub.s32 %s8, 2
      // Predicated region
      $region37: #{segformer_head_forward.7} parent=35 // pred_check
        %p316 = pneg %p84
      $region38: #{segformer_head_forward.7} parent=35 // pred_check_branch
        %318 = sbr.rel (%p316) target = $region40
      $region39: #{segformer_head_forward.7} parent=35 // pred_region
        %s319 = smul.u32 8, %s14
        %p320 = scmp.lt.s32.totalorder %s319, 15
        %s321 = scalar_select %p320, %s319, 15
        %s322 = smul.addr %s321, 4
        %s323 = scalar_lea.vmem %s2, %s322
      $region40: #{segformer_head_forward.7} parent=35 // pred_fallthru
        _
    $region36: #{segformer_head_forward.7} parent=5 // pred_fallthru
      _
  $region6: #{segformer_head_forward.7} parent=0 // loop_footer
    %s12 = sadd.s32 1, %s8
  $region7: #{segformer_head_forward.7} parent=0 // loop_footer_branch
    %7 = sbr.rel target = $region3
  $region8: #{segformer_head_forward.7} parent=0 // loop_exit
    _

// kernel: segformer_head_forward.8
$region0: #{segformer_head_forward.8}
  #allocation0 [shape = 'u32[]', space=smem, size = 0x4, offset = 0x4, fixed_abs, tag = 'smem constant byte address 0x4 - core index']
  #allocation1 [shape = 'u32[144,128]{1,0:T(1,128)}', space=vmem, size = 0x12000, scoped, tag = 'internal scratch']
  %s0 = inlined_call_operand.vmem [shape: bf16[512,8], index: 0, kind: input, shape index: {}]
  %s1 = inlined_call_operand.vmem [shape: bf16[8,128], index: 1, kind: input, shape index: {}]
  %s2 = inlined_call_operand.vmem [shape: bf16[512,128], index: 2, kind: output, shape index: {}]
  %s3 = sld [smem:[#allocation0]]
  $region41: #{segformer_head_forward.8} parent=0
    _
  %s5 = ssub.s32 1, %s3
  %s6 = scalar_select 0, %s5, %s3
  loop: start=0, step=1, limit=4
  $region2: #{segformer_head_forward.8} parent=0 // loop_pre_header
    _
  $region3: #{segformer_head_forward.8} parent=0 // loop_header
    %s8 = sphi 0, %s12
    %p9 = scmp.ge.s32.totalorder %s8, 4
    %s18 = sphi 0, %s20
    %s21 = sphi 0, %s18
    %s22 = sphi 0, %s21
    %s38 = sphi 0, %s22
    %s42 = sphi 0, %s42
    %s44 = sphi 0, %s42
    %s45 = sphi 0, %s44
    %s59 = sphi 0, %s45
    %s65 = sphi 0, %s67
    %s68 = sphi 0, %s65
    %s69 = sphi 0, %s68
    %s85 = sphi 0, %s69
  $region4: #{segformer_head_forward.8} parent=0 // loop_header_branch
    %11 = sbr.rel (%p9) target = $region8
  $region5: #{segformer_head_forward.8} parent=0 // loop_body
    %s13 = ssub.s32 %s8, 1
    %s14 = ssub.s32 %s8, 2
    %s15 = sadd.s32 %s8, 1
    %s16 = ssub.s32 %s8, %s15
    %p17 = scmp.eq.s32.totalorder %s16, 0
    %s19 = sadd.s32 %s18, 1
    %s20 = scalar_select %p17, %s18, %s19
    %p23 = pneg %p17
    %p24 = scmp.eq.s32.totalorder %s8, 1
    %p25 = por %p23, %p24
    %p26 = scmp.ne.s32.totalorder %s18, %s21
    %p27 = scmp.eq.s32.totalorder %s8, 0
    %p28 = por %p26, %p27
    %p29 = scmp.ne.s32.totalorder %s18, %s21
    %p30 = scmp.eq.s32.totalorder %s13, 1
    %p31 = por %p29, %p30
    %p32 = scmp.ne.s32.totalorder %s21, %s22
    %p33 = scmp.eq.s32.totalorder %s13, 0
    %p34 = por %p32, %p33
    %p35 = scmp.ne.s32.totalorder %s21, %s22
    %p36 = scmp.eq.s32.totalorder %s14, 1
    %p37 = por %p35, %p36
    %p39 = scmp.ne.s32.totalorder %s22, %s38
    %p40 = scmp.eq.s32.totalorder %s14, 0
    %p41 = por %p39, %p40
    %s43 = sadd.s32 %s42, 1
    %p46 = scmp.eq.s32.totalorder %s8, 1
    %p47 = scmp.ne.s32.totalorder %s42, %s44
    %p48 = scmp.eq.s32.totalorder %s8, 0
    %p49 = por %p47, %p48
    %p50 = scmp.ne.s32.totalorder %s42, %s44
    %p51 = scmp.eq.s32.totalorder %s13, 1
    %p52 = por %p50, %p51
    %p53 = scmp.ne.s32.totalorder %s44, %s45
    %p54 = scmp.eq.s32.totalorder %s13, 0
    %p55 = por %p53, %p54
    %p56 = scmp.ne.s32.totalorder %s44, %s45
    %p57 = scmp.eq.s32.totalorder %s14, 1
    %p58 = por %p56, %p57
    %p60 = scmp.ne.s32.totalorder %s45, %s59
    %p61 = scmp.eq.s32.totalorder %s14, 0
    %p62 = por %p60, %p61
    %s63 = ssub.s32 %s8, %s15
    %p64 = scmp.eq.s32.totalorder %s63, 0
    %s66 = sadd.s32 %s65, 1
    %s67 = scalar_select %p64, %s65, %s66
    %p70 = pneg %p64
    %p71 = scmp.eq.s32.totalorder %s8, 1
    %p72 = por %p70, %p71
    %p73 = scmp.ne.s32.totalorder %s65, %s68
    %p74 = scmp.eq.s32.totalorder %s8, 0
    %p75 = por %p73, %p74
    %p76 = scmp.ne.s32.totalorder %s65, %s68
    %p77 = scmp.eq.s32.totalorder %s13, 1
    %p78 = por %p76, %p77
    %p79 = scmp.ne.s32.totalorder %s68, %s69
    %p80 = scmp.eq.s32.totalorder %s13, 0
    %p81 = por %p79, %p80
    %p82 = scmp.ne.s32.totalorder %s68, %s69
    %p83 = scmp.eq.s32.totalorder %s14, 1
    %p84 = por %p82, %p83
    %p86 = scmp.ne.s32.totalorder %s69, %s85
    %p87 = scmp.eq.s32.totalorder %s14, 0
    %p88 = por %p86, %p87
    %p89 = scmp.le.s32.totalorder 1, %s8
    %p90 = scmp.lt.s32.totalorder %s8, 3
    %p91 = pnand %p89, %p90
    %p92 = pneg %p91
    // Predicated region
    $region9: #{segformer_head_forward.8} parent=5 // pred_check
      _
    $region10: #{segformer_head_forward.8} parent=5 // pred_check_branch
      %94 = sbr.rel (%p91) target = $region12
    $region11: #{segformer_head_forward.8} parent=5 // pred_region
      %s95 = ssub.s32 %s8, 1
      // Predicated region
      $region13: #{segformer_head_forward.8} parent=11 // pred_check
        %p96 = pneg %p55
      $region14: #{segformer_head_forward.8} parent=11 // pred_check_branch
        %98 = sbr.rel (%p96) target = $region16
      $region15: #{segformer_head_forward.8} parent=11 // pred_region
        _
      $region16: #{segformer_head_forward.8} parent=11 // pred_fallthru
        _
    $region12: #{segformer_head_forward.8} parent=5 // pred_fallthru
      _
    %p99 = scmp.lt.s32.totalorder %s8, 2
    // Predicated region
    $region17: #{segformer_head_forward.8} parent=5 // pred_check
      %p100 = pneg %p99
    $region18: #{segformer_head_forward.8} parent=5 // pred_check_branch
      %102 = sbr.rel (%p100) target = $region20
    $region19: #{segformer_head_forward.8} parent=5 // pred_region
      // Predicated region
      $region21: #{segformer_head_forward.8} parent=19 // pred_check
        %p103 = pneg %p28
      $region22: #{segformer_head_forward.8} parent=19 // pred_check_branch
        %105 = sbr.rel (%p103) target = $region24
      $region23: #{segformer_head_forward.8} parent=19 // pred_region
        %s106 = smul.u32 32, %s8
        %p107 = scmp.lt.s32.totalorder %s106, 63
        %s108 = scalar_select %p107, %s106, 63
        %s109 = smul.addr %s108, 4
        %s110 = scalar_lea.vmem %s0, %s109
        %s111 = smul.u32 32, %s8
      $region24: #{segformer_head_forward.8} parent=19 // pred_fallthru
        _
    $region20: #{segformer_head_forward.8} parent=5 // pred_fallthru
      _
    %p112 = scmp.le.s32.totalorder 1, %s8
    %p113 = scmp.lt.s32.totalorder %s8, 3
    %p114 = pnand %p112, %p113
    %p115 = pneg %p114
    // Predicated region
    $region25: #{segformer_head_forward.8} parent=5 // pred_check
      _
    $region26: #{segformer_head_forward.8} parent=5 // pred_check_branch
      %117 = sbr.rel (%p114) target = $region28
    $region27: #{segformer_head_forward.8} parent=5 // pred_region
      %s118 = ssub.s32 %s8, 1
      %s119 = smul.u32 32, %s13
      %p120 = scmp.lt.s32.totalorder %s119, 63
      %s121 = scalar_select %p120, %s119, 63
      %s122 = smul.addr %s121, 4
      %s123 = scalar_lea.vmem %s0, %s122
      %p124 = pneg %p34
      %p125 = pneg %p31
      %p126 = pneg %p55
      %p127 = pneg %p52
      %p128 = pneg %p81
      %p129 = pneg %p78
      %s130 = smul.u32 32, %s13
      %p131 = scmp.lt.s32.totalorder %s130, 63
      %s132 = scalar_select %p131, %s130, 63
      %s133 = smul.addr %s132, 4
      %s134 = scalar_lea.vmem %s2, %s133
      %s135 = smul.u32 32, %s13
      %p136 = scmp.lt.s32.totalorder %s135, 63
      %s137 = scalar_select %p136, %s135, 63
      %s138 = smul.addr %s137, 4
      %s139 = scalar_lea.vmem %s0, %s138
      %s140 = smul.u32 32, %s13
      %s141 = smul.u32 32, %s13
      %p142 = scmp.lt.s32.totalorder %s141, 63
      %s143 = scalar_select %p142, %s141, 63
      %s144 = smul.addr %s143, 4
      %s145 = scalar_lea.vmem %s2, %s144
      %s146 = smul.u32 32, %s13
      %v148 = vld [vmem:[%s139] sm:$0xf]
      %v149 = vld [vmem:[%s139 + $0x4] sm:$0xf]
      %v150 = vld [vmem:[%s139 + $0x8] sm:$0xf]
      %v151 = vld [vmem:[%s139 + $0xc] sm:$0xf]
      %v152 = vld [vmem:[%s139 + $0x10] sm:$0xf]
      %v153 = vld [vmem:[%s139 + $0x14] sm:$0xf]
      %v154 = vld [vmem:[%s139 + $0x18] sm:$0xf]
      %v155 = vld [vmem:[%s139 + $0x1c] sm:$0xf]
      %v156 = vld [vmem:[%s139 + $0x20] sm:$0xf]
      %v157 = vld [vmem:[%s139 + $0x24] sm:$0xf]
      %v158 = vld [vmem:[%s139 + $0x28] sm:$0xf]
      %v159 = vld [vmem:[%s139 + $0x2c] sm:$0xf]
      %v160 = vld [vmem:[%s139 + $0x30] sm:$0xf]
      %v161 = vld [vmem:[%s139 + $0x34] sm:$0xf]
      %v162 = vld [vmem:[%s139 + $0x38] sm:$0xf]
      %v163 = vld [vmem:[%s139 + $0x3c] sm:$0xf]
      %v164 = vld [vmem:[%s139 + $0x40] sm:$0xf]
      %v165 = vld [vmem:[%s139 + $0x44] sm:$0xf]
      %v166 = vld [vmem:[%s139 + $0x48] sm:$0xf]
      %v167 = vld [vmem:[%s139 + $0x4c] sm:$0xf]
      %v168 = vld [vmem:[%s139 + $0x50] sm:$0xf]
      %v169 = vld [vmem:[%s139 + $0x54] sm:$0xf]
      %v170 = vld [vmem:[%s139 + $0x58] sm:$0xf]
      %v171 = vld [vmem:[%s139 + $0x5c] sm:$0xf]
      %v172 = vld [vmem:[%s139 + $0x60] sm:$0xf]
      %v173 = vld [vmem:[%s139 + $0x64] sm:$0xf]
      %v174 = vld [vmem:[%s139 + $0x68] sm:$0xf]
      %v175 = vld [vmem:[%s139 + $0x6c] sm:$0xf]
      %v176 = vld [vmem:[%s139 + $0x70] sm:$0xf]
      %v177 = vld [vmem:[%s139 + $0x74] sm:$0xf]
      %v178 = vld [vmem:[%s139 + $0x78] sm:$0xf]
      %v179 = vld [vmem:[%s139 + $0x7c] sm:$0xf]
      %v180 = vld [vmem:[%s1] sm:$0xf]
      %v213 = vunpack.c.l.b16 %v148
      %v214 = vunpack.c.l.b16 %v149
      %v215 = vunpack.c.l.b16 %v150
      %v216 = vunpack.c.l.b16 %v151
      %v217 = vunpack.c.l.b16 %v152
      %v218 = vunpack.c.l.b16 %v153
      %v219 = vunpack.c.l.b16 %v154
      %v220 = vunpack.c.l.b16 %v155
      %v221 = vunpack.c.l.b16 %v156
      %v222 = vunpack.c.l.b16 %v157
      %v223 = vunpack.c.l.b16 %v158
      %v224 = vunpack.c.l.b16 %v159
      %v225 = vunpack.c.l.b16 %v160
      %v226 = vunpack.c.l.b16 %v161
      %v227 = vunpack.c.l.b16 %v162
      %v228 = vunpack.c.l.b16 %v163
      %v229 = vunpack.c.l.b16 %v164
      %v230 = vunpack.c.l.b16 %v165
      %v231 = vunpack.c.l.b16 %v166
      %v232 = vunpack.c.l.b16 %v167
      %v233 = vunpack.c.l.b16 %v168
      %v234 = vunpack.c.l.b16 %v169
      %v235 = vunpack.c.l.b16 %v170
      %v236 = vunpack.c.l.b16 %v171
      %v237 = vunpack.c.l.b16 %v172
      %v238 = vunpack.c.l.b16 %v173
      %v239 = vunpack.c.l.b16 %v174
      %v240 = vunpack.c.l.b16 %v175
      %v241 = vunpack.c.l.b16 %v176
      %v242 = vunpack.c.l.b16 %v177
      %v243 = vunpack.c.l.b16 %v178
      %v244 = vunpack.c.l.b16 %v179
      %v245 = vpack.c.b16 %v214, %v213
      %v246 = vpack.c.b16 %v216, %v215
      %v247 = vpack.c.b16 %v218, %v217
      %v248 = vpack.c.b16 %v220, %v219
      %v249 = vpack.c.b16 %v222, %v221
      %v250 = vpack.c.b16 %v224, %v223
      %v251 = vpack.c.b16 %v226, %v225
      %v252 = vpack.c.b16 %v228, %v227
      %v253 = vpack.c.b16 %v230, %v229
      %v254 = vpack.c.b16 %v232, %v231
      %v255 = vpack.c.b16 %v234, %v233
      %v256 = vpack.c.b16 %v236, %v235
      %v257 = vpack.c.b16 %v238, %v237
      %v258 = vpack.c.b16 %v240, %v239
      %v259 = vpack.c.b16 %v242, %v241
      %v260 = vpack.c.b16 %v244, %v243
      %vm261 = vcmask 64512
      %v263 = vsel %vm261, %v245, 0
      %v266 = vsel %vm261, %v246, 0
      %v269 = vsel %vm261, %v247, 0
      %v272 = vsel %vm261, %v248, 0
      %v275 = vsel %vm261, %v249, 0
      %v278 = vsel %vm261, %v250, 0
      %v281 = vsel %vm261, %v251, 0
      %v284 = vsel %vm261, %v252, 0
      %v287 = vsel %vm261, %v253, 0
      %v290 = vsel %vm261, %v254, 0
      %v293 = vsel %vm261, %v255, 0
      %v296 = vsel %vm261, %v256, 0
      %v299 = vsel %vm261, %v257, 0
      %v302 = vsel %vm261, %v258, 0
      %v305 = vsel %vm261, %v259, 0
      %v308 = vsel %vm261, %v260, 0
      %vm310 = vcmask 1043456
      %v312 = vsel %vm310, %v180, 0
      %314 = vmatprep.subr.bf16.mxu0 0
      %315 = vmatpush1.bf16.msra.mxu0 %v312
      %316 = vmatprep.subr.bf16.mxu0 0
      %317 = vmatpush1.bf16.msra.mxu0 0
      %318 = vmatprep.subr.bf16.mxu0 0
      %319 = vmatpush1.bf16.msra.mxu0 0
      %320 = vmatprep.subr.bf16.mxu0 0
      %321 = vmatpush1.bf16.msra.mxu0 0
      %322 = vmatprep.subr.bf16.mxu0 0
      %323 = vmatpush1.bf16.msra.mxu0 0
      %324 = vmatprep.subr.bf16.mxu0 0
      %325 = vmatpush1.bf16.msra.mxu0 0
      %326 = vmatprep.subr.bf16.mxu0 0
      %327 = vmatpush1.bf16.msra.mxu0 0
      %328 = vmatprep.subr.bf16.mxu0 0
      %329 = vmatpush1.bf16.msra.mxu0 0
      %330 = vmatprep.subr.bf16.mxu0 0
      %331 = vmatpush1.bf16.msra.mxu0 0
      %332 = vmatprep.subr.bf16.mxu0 0
      %333 = vmatpush1.bf16.msra.mxu0 0
      %334 = vmatprep.subr.bf16.mxu0 0
      %335 = vmatpush1.bf16.msra.mxu0 0
      %336 = vmatprep.subr.bf16.mxu0 0
      %337 = vmatpush1.bf16.msra.mxu0 0
      %338 = vmatprep.subr.bf16.mxu0 0
      %339 = vmatpush1.bf16.msra.mxu0 0
      %340 = vmatprep.subr.bf16.mxu0 0
      %341 = vmatpush1.bf16.msra.mxu0 0
      %342 = vmatprep.subr.bf16.mxu0 0
      %343 = vmatpush1.bf16.msra.mxu0 0
      %344 = vmatprep.subr.bf16.mxu0 0
      %345 = vmatpush1.bf16.msra.mxu0 0
      %346 = vmatprep.mubr.bf16.mxu0 0
      %347 = vmatmul.mubr.bf16.gmra.mrb[0].mxu0 %v263
      %v348 = vpop.f32.mrb[0].mxu0
      %v349 = vadd.f32 0.0, %v348
      %v350 = vpop.f32.mrb[0].mxu0
      %v351 = vpop.f32.mrb[0].mxu0
      %v352 = vadd.f32 0.0, %v351
      %v353 = vpop.f32.mrb[0].mxu0
      %354 = vmatprep.mubr.bf16.mxu0 0
      %355 = vmatmul.mubr.bf16.gmra.mrb[0].mxu0 %v266
      %v356 = vpop.f32.mrb[0].mxu0
      %v357 = vadd.f32 0.0, %v356
      %v358 = vpop.f32.mrb[0].mxu0
      %v359 = vpop.f32.mrb[0].mxu0
      %v360 = vadd.f32 0.0, %v359
      %v361 = vpop.f32.mrb[0].mxu0
      %362 = vmatprep.mubr.bf16.mxu0 0
      %363 = vmatmul.mubr.bf16.gmra.mrb[0].mxu0 %v269
      %v364 = vpop.f32.mrb[0].mxu0
      %v365 = vadd.f32 0.0, %v364
      %v366 = vpop.f32.mrb[0].mxu0
      %v367 = vpop.f32.mrb[0].mxu0
      %v368 = vadd.f32 0.0, %v367
      %v369 = vpop.f32.mrb[0].mxu0
      %370 = vmatprep.mubr.bf16.mxu0 0
      %371 = vmatmul.mubr.bf16.gmra.mrb[0].mxu0 %v272
      %v372 = vpop.f32.mrb[0].mxu0
      %v373 = vadd.f32 0.0, %v372
      %v374 = vpop.f32.mrb[0].mxu0
      %v375 = vpop.f32.mrb[0].mxu0
      %v376 = vadd.f32 0.0, %v375
      %v377 = vpop.f32.mrb[0].mxu0
      %378 = vmatprep.mubr.bf16.mxu0 0
      %379 = vmatmul.mubr.bf16.gmra.mrb[0].mxu0 %v275
      %v380 = vpop.f32.mrb[0].mxu0
      %v381 = vadd.f32 0.0, %v380
      %v382 = vpop.f32.mrb[0].mxu0
      %v383 = vpop.f32.mrb[0].mxu0
      %v384 = vadd.f32 0.0, %v383
      %v385 = vpop.f32.mrb[0].mxu0
      %386 = vmatprep.mubr.bf16.mxu0 0
      %387 = vmatmul.mubr.bf16.gmra.mrb[0].mxu0 %v278
      %v388 = vpop.f32.mrb[0].mxu0
      %v389 = vadd.f32 0.0, %v388
      %v390 = vpop.f32.mrb[0].mxu0
      %v391 = vpop.f32.mrb[0].mxu0
      %v392 = vadd.f32 0.0, %v391
      %v393 = vpop.f32.mrb[0].mxu0
      %394 = vmatprep.mubr.bf16.mxu0 0
      %395 = vmatmul.mubr.bf16.gmra.mrb[0].mxu0 %v281
      %v396 = vpop.f32.mrb[0].mxu0
      %v397 = vadd.f32 0.0, %v396
      %v398 = vpop.f32.mrb[0].mxu0
      %v399 = vpop.f32.mrb[0].mxu0
      %v400 = vadd.f32 0.0, %v399
      %v401 = vpop.f32.mrb[0].mxu0
      %402 = vmatprep.mubr.bf16.mxu0 0
      %403 = vmatmul.mubr.bf16.gmra.mrb[0].mxu0 %v284
      %v404 = vpop.f32.mrb[0].mxu0
      %v405 = vadd.f32 0.0, %v404
      %v406 = vpop.f32.mrb[0].mxu0
      %v407 = vpop.f32.mrb[0].mxu0
      %v408 = vadd.f32 0.0, %v407
      %v409 = vpop.f32.mrb[0].mxu0
      %410 = vmatprep.mubr.bf16.mxu0 0
      %411 = vmatmul.mubr.bf16.gmra.mrb[0].mxu0 %v287
      %v412 = vpop.f32.mrb[0].mxu0
      %v413 = vadd.f32 0.0, %v412
      %v414 = vpop.f32.mrb[0].mxu0
      %v415 = vpop.f32.mrb[0].mxu0
      %v416 = vadd.f32 0.0, %v415
      %v417 = vpop.f32.mrb[0].mxu0
      %418 = vmatprep.mubr.bf16.mxu0 0
      %419 = vmatmul.mubr.bf16.gmra.mrb[0].mxu0 %v290
      %v420 = vpop.f32.mrb[0].mxu0
      %v421 = vadd.f32 0.0, %v420
      %v422 = vpop.f32.mrb[0].mxu0
      %v423 = vpop.f32.mrb[0].mxu0
      %v424 = vadd.f32 0.0, %v423
      %v425 = vpop.f32.mrb[0].mxu0
      %426 = vmatprep.mubr.bf16.mxu0 0
      %427 = vmatmul.mubr.bf16.gmra.mrb[0].mxu0 %v293
      %v428 = vpop.f32.mrb[0].mxu0
      %v429 = vadd.f32 0.0, %v428
      %v430 = vpop.f32.mrb[0].mxu0
      %v431 = vpop.f32.mrb[0].mxu0
      %v432 = vadd.f32 0.0, %v431
      %v433 = vpop.f32.mrb[0].mxu0
      %434 = vmatprep.mubr.bf16.mxu0 0
      %435 = vmatmul.mubr.bf16.gmra.mrb[0].mxu0 %v296
      %v436 = vpop.f32.mrb[0].mxu0
      %v437 = vadd.f32 0.0, %v436
      %v438 = vpop.f32.mrb[0].mxu0
      %v439 = vpop.f32.mrb[0].mxu0
      %v440 = vadd.f32 0.0, %v439
      %v441 = vpop.f32.mrb[0].mxu0
      %442 = vmatprep.mubr.bf16.mxu0 0
      %443 = vmatmul.mubr.bf16.gmra.mrb[0].mxu0 %v299
      %v444 = vpop.f32.mrb[0].mxu0
      %v445 = vadd.f32 0.0, %v444
      %v446 = vpop.f32.mrb[0].mxu0
      %v447 = vpop.f32.mrb[0].mxu0
      %v448 = vadd.f32 0.0, %v447
      %v449 = vpop.f32.mrb[0].mxu0
      %450 = vmatprep.mubr.bf16.mxu0 0
      %451 = vmatmul.mubr.bf16.gmra.mrb[0].mxu0 %v302
      %v452 = vpop.f32.mrb[0].mxu0
      %v453 = vadd.f32 0.0, %v452
      %v454 = vpop.f32.mrb[0].mxu0
      %v455 = vpop.f32.mrb[0].mxu0
      %v456 = vadd.f32 0.0, %v455
      %v457 = vpop.f32.mrb[0].mxu0
      %458 = vmatprep.mubr.bf16.mxu0 0
      %459 = vmatmul.mubr.bf16.gmra.mrb[0].mxu0 %v305
      %v460 = vpop.f32.mrb[0].mxu0
      %v461 = vadd.f32 0.0, %v460
      %v462 = vpop.f32.mrb[0].mxu0
      %v463 = vpop.f32.mrb[0].mxu0
      %v464 = vadd.f32 0.0, %v463
      %v465 = vpop.f32.mrb[0].mxu0
      %466 = vmatprep.mubr.bf16.mxu0 0
      %467 = vmatmul.mubr.bf16.gmra.mrb[0].mxu0 %v308
      %v468 = vpop.f32.mrb[0].mxu0
      %v469 = vadd.f32 0.0, %v468
      %v470 = vpop.f32.mrb[0].mxu0
      %v471 = vpop.f32.mrb[0].mxu0
      %v472 = vadd.f32 0.0, %v471
      %v473 = vpop.f32.mrb[0].mxu0
      %474 = vdwg.mxu0
      %v475 = vpack.c.bf16 %v352, %v349
      %v476 = vpack.c.bf16 %v360, %v357
      %v477 = vpack.c.bf16 %v368, %v365
      %v478 = vpack.c.bf16 %v376, %v373
      %v479 = vpack.c.bf16 %v384, %v381
      %v480 = vpack.c.bf16 %v392, %v389
      %v481 = vpack.c.bf16 %v400, %v397
      %v482 = vpack.c.bf16 %v408, %v405
      %v483 = vpack.c.bf16 %v416, %v413
      %v484 = vpack.c.bf16 %v424, %v421
      %v485 = vpack.c.bf16 %v432, %v429
      %v486 = vpack.c.bf16 %v440, %v437
      %v487 = vpack.c.bf16 %v448, %v445
      %v488 = vpack.c.bf16 %v456, %v453
      %v489 = vpack.c.bf16 %v464, %v461
      %v490 = vpack.c.bf16 %v472, %v469
      %v507 = vunpack.c.l.b16 %v475
      %v508 = vunpack.c.h.b16 %v475
      %v509 = vunpack.c.l.b16 %v476
      %v510 = vunpack.c.h.b16 %v476
      %v511 = vunpack.c.l.b16 %v477
      %v512 = vunpack.c.h.b16 %v477
      %v513 = vunpack.c.l.b16 %v478
      %v514 = vunpack.c.h.b16 %v478
      %v515 = vunpack.c.l.b16 %v479
      %v516 = vunpack.c.h.b16 %v479
      %v517 = vunpack.c.l.b16 %v480
      %v518 = vunpack.c.h.b16 %v480
      %v519 = vunpack.c.l.b16 %v481
      %v520 = vunpack.c.h.b16 %v481
      %v521 = vunpack.c.l.b16 %v482
      %v522 = vunpack.c.h.b16 %v482
      %v523 = vunpack.c.l.b16 %v483
      %v524 = vunpack.c.h.b16 %v483
      %v525 = vunpack.c.l.b16 %v484
      %v526 = vunpack.c.h.b16 %v484
      %v527 = vunpack.c.l.b16 %v485
      %v528 = vunpack.c.h.b16 %v485
      %v529 = vunpack.c.l.b16 %v486
      %v530 = vunpack.c.h.b16 %v486
      %v531 = vunpack.c.l.b16 %v487
      %v532 = vunpack.c.h.b16 %v487
      %v533 = vunpack.c.l.b16 %v488
      %v534 = vunpack.c.h.b16 %v488
      %v535 = vunpack.c.l.b16 %v489
      %v536 = vunpack.c.h.b16 %v489
      %v537 = vunpack.c.l.b16 %v490
      %v538 = vunpack.c.h.b16 %v490
      %v539 = vpack.c.b16 %v507, %v507
      %v540 = vpack.c.b16 %v508, %v508
      %v541 = vpack.c.b16 %v509, %v509
      %v542 = vpack.c.b16 %v510, %v510
      %v543 = vpack.c.b16 %v511, %v511
      %v544 = vpack.c.b16 %v512, %v512
      %v545 = vpack.c.b16 %v513, %v513
      %v546 = vpack.c.b16 %v514, %v514
      %v547 = vpack.c.b16 %v515, %v515
      %v548 = vpack.c.b16 %v516, %v516
      %v549 = vpack.c.b16 %v517, %v517
      %v550 = vpack.c.b16 %v518, %v518
      %v551 = vpack.c.b16 %v519, %v519
      %v552 = vpack.c.b16 %v520, %v520
      %v553 = vpack.c.b16 %v521, %v521
      %v554 = vpack.c.b16 %v522, %v522
      %v555 = vpack.c.b16 %v523, %v523
      %v556 = vpack.c.b16 %v524, %v524
      %v557 = vpack.c.b16 %v525, %v525
      %v558 = vpack.c.b16 %v526, %v526
      %v559 = vpack.c.b16 %v527, %v527
      %v560 = vpack.c.b16 %v528, %v528
      %v561 = vpack.c.b16 %v529, %v529
      %v562 = vpack.c.b16 %v530, %v530
      %v563 = vpack.c.b16 %v531, %v531
      %v564 = vpack.c.b16 %v532, %v532
      %v565 = vpack.c.b16 %v533, %v533
      %v566 = vpack.c.b16 %v534, %v534
      %v567 = vpack.c.b16 %v535, %v535
      %v568 = vpack.c.b16 %v536, %v536
      %v569 = vpack.c.b16 %v537, %v537
      %v570 = vpack.c.b16 %v538, %v538
      %603 = vst [vmem:[%s145] sm:$0xf] %v539
      %604 = vst [vmem:[%s145 + $0x4] sm:$0xf] %v540
      %605 = vst [vmem:[%s145 + $0x8] sm:$0xf] %v541
      %606 = vst [vmem:[%s145 + $0xc] sm:$0xf] %v542
      %607 = vst [vmem:[%s145 + $0x10] sm:$0xf] %v543
      %608 = vst [vmem:[%s145 + $0x14] sm:$0xf] %v544
      %609 = vst [vmem:[%s145 + $0x18] sm:$0xf] %v545
      %610 = vst [vmem:[%s145 + $0x1c] sm:$0xf] %v546
      %611 = vst [vmem:[%s145 + $0x20] sm:$0xf] %v547
      %612 = vst [vmem:[%s145 + $0x24] sm:$0xf] %v548
      %613 = vst [vmem:[%s145 + $0x28] sm:$0xf] %v549
      %614 = vst [vmem:[%s145 + $0x2c] sm:$0xf] %v550
      %615 = vst [vmem:[%s145 + $0x30] sm:$0xf] %v551
      %616 = vst [vmem:[%s145 + $0x34] sm:$0xf] %v552
      %617 = vst [vmem:[%s145 + $0x38] sm:$0xf] %v553
      %618 = vst [vmem:[%s145 + $0x3c] sm:$0xf] %v554
      %619 = vst [vmem:[%s145 + $0x40] sm:$0xf] %v555
      %620 = vst [vmem:[%s145 + $0x44] sm:$0xf] %v556
      %621 = vst [vmem:[%s145 + $0x48] sm:$0xf] %v557
      %622 = vst [vmem:[%s145 + $0x4c] sm:$0xf] %v558
      %623 = vst [vmem:[%s145 + $0x50] sm:$0xf] %v559
      %624 = vst [vmem:[%s145 + $0x54] sm:$0xf] %v560
      %625 = vst [vmem:[%s145 + $0x58] sm:$0xf] %v561
      %626 = vst [vmem:[%s145 + $0x5c] sm:$0xf] %v562
      %627 = vst [vmem:[%s145 + $0x60] sm:$0xf] %v563
      %628 = vst [vmem:[%s145 + $0x64] sm:$0xf] %v564
      %629 = vst [vmem:[%s145 + $0x68] sm:$0xf] %v565
      %630 = vst [vmem:[%s145 + $0x6c] sm:$0xf] %v566
      %631 = vst [vmem:[%s145 + $0x70] sm:$0xf] %v567
      %632 = vst [vmem:[%s145 + $0x74] sm:$0xf] %v568
      %633 = vst [vmem:[%s145 + $0x78] sm:$0xf] %v569
      %634 = vst [vmem:[%s145 + $0x7c] sm:$0xf] %v570
      %s635 = smul.u32 32, %s13
      %p636 = scmp.lt.s32.totalorder %s635, 63
      %s637 = scalar_select %p636, %s635, 63
      %s638 = smul.addr %s637, 4
      %s639 = scalar_lea.vmem %s2, %s638
      // Predicated region
      $region29: #{segformer_head_forward.8} parent=27 // pred_check
        %p640 = pneg %p78
      $region30: #{segformer_head_forward.8} parent=27 // pred_check_branch
        %642 = sbr.rel (%p640) target = $region32
      $region31: #{segformer_head_forward.8} parent=27 // pred_region
        %s643 = smul.u32 32, %s13
      $region32: #{segformer_head_forward.8} parent=27 // pred_fallthru
        _
    $region28: #{segformer_head_forward.8} parent=5 // pred_fallthru
      _
    %p644 = scmp.le.s32.totalorder 2, %s8
    // Predicated region
    $region33: #{segformer_head_forward.8} parent=5 // pred_check
      %p645 = pneg %p644
    $region34: #{segformer_head_forward.8} parent=5 // pred_check_branch
      %647 = sbr.rel (%p645) target = $region36
    $region35: #{segformer_head_forward.8} parent=5 // pred_region
      %s648 = ssub.s32 %s8, 2
      // Predicated region
      $region37: #{segformer_head_forward.8} parent=35 // pred_check
        %p649 = pneg %p84
      $region38: #{segformer_head_forward.8} parent=35 // pred_check_branch
        %651 = sbr.rel (%p649) target = $region40
      $region39: #{segformer_head_forward.8} parent=35 // pred_region
        %s652 = smul.u32 32, %s14
        %p653 = scmp.lt.s32.totalorder %s652, 63
        %s654 = scalar_select %p653, %s652, 63
        %s655 = smul.addr %s654, 4
        %s656 = scalar_lea.vmem %s2, %s655
      $region40: #{segformer_head_forward.8} parent=35 // pred_fallthru
        _
    $region36: #{segformer_head_forward.8} parent=5 // pred_fallthru
      _
  $region6: #{segformer_head_forward.8} parent=0 // loop_footer
    %s12 = sadd.s32 1, %s8
  $region7: #{segformer_head_forward.8} parent=0 // loop_footer_branch
    %7 = sbr.rel target = $region3
  $region8: #{segformer_head_forward.8} parent=0 // loop_exit
    _

// kernel: segformer_head_forward.9
$region0: #{segformer_head_forward.9}
  #allocation0 [shape = 'u32[]', space=smem, size = 0x4, offset = 0x4, fixed_abs, tag = 'smem constant byte address 0x4 - core index']
  #allocation1 [shape = 'u32[144,128]{1,0:T(1,128)}', space=vmem, size = 0x12000, scoped, tag = 'internal scratch']
  %s0 = inlined_call_operand.vmem [shape: bf16[512,128], index: 0, kind: input, shape index: {}]
  %s1 = inlined_call_operand.vmem [shape: bf16[512,128], index: 1, kind: input, shape index: {}]
  %s2 = inlined_call_operand.vmem [shape: bf16[512,128], index: 2, kind: input, shape index: {}]
  %s3 = inlined_call_operand.vmem [shape: bf16[512,128], index: 3, kind: input, shape index: {}]
  %s4 = inlined_call_operand.vmem [shape: f32[1,128], index: 4, kind: input, shape index: {}]
  %s5 = inlined_call_operand.vmem [shape: bf16[128,128], index: 5, kind: input, shape index: {}]
  %s6 = inlined_call_operand.vmem [shape: f32[1,128], index: 6, kind: input, shape index: {}]
  %s7 = inlined_call_operand.vmem [shape: f32[512,128], index: 7, kind: output, shape index: {}]
  %s8 = sld [smem:[#allocation0]]
  $region61: #{segformer_head_forward.9} parent=0
    _
  %s10 = ssub.s32 1, %s8
  %s11 = scalar_select 0, %s10, %s8
  loop: start=0, step=1, limit=4
  $region2: #{segformer_head_forward.9} parent=0 // loop_pre_header
    _
  $region3: #{segformer_head_forward.9} parent=0 // loop_header
    %s13 = sphi 0, %s17
    %p14 = scmp.ge.s32.totalorder %s13, 4
    %s23 = sphi 0, %s25
    %s26 = sphi 0, %s23
    %s27 = sphi 0, %s26
    %s43 = sphi 0, %s27
    %s49 = sphi 0, %s51
    %s52 = sphi 0, %s49
    %s53 = sphi 0, %s52
    %s69 = sphi 0, %s53
    %s75 = sphi 0, %s77
    %s78 = sphi 0, %s75
    %s79 = sphi 0, %s78
    %s95 = sphi 0, %s79
    %s101 = sphi 0, %s103
    %s104 = sphi 0, %s101
    %s105 = sphi 0, %s104
    %s121 = sphi 0, %s105
    %s125 = sphi 0, %s125
    %s127 = sphi 0, %s125
    %s128 = sphi 0, %s127
    %s142 = sphi 0, %s128
    %s146 = sphi 0, %s146
    %s148 = sphi 0, %s146
    %s149 = sphi 0, %s148
    %s163 = sphi 0, %s149
    %s167 = sphi 0, %s167
    %s169 = sphi 0, %s167
    %s170 = sphi 0, %s169
    %s184 = sphi 0, %s170
    %s190 = sphi 0, %s192
    %s193 = sphi 0, %s190
    %s194 = sphi 0, %s193
    %s210 = sphi 0, %s194
  $region4: #{segformer_head_forward.9} parent=0 // loop_header_branch
    %16 = sbr.rel (%p14) target = $region8
  $region5: #{segformer_head_forward.9} parent=0 // loop_body
    %s18 = ssub.s32 %s13, 1
    %s19 = ssub.s32 %s13, 2
    %s20 = sadd.s32 %s13, 1
    %s21 = ssub.s32 %s13, %s20
    %p22 = scmp.eq.s32.totalorder %s21, 0
    %s24 = sadd.s32 %s23, 1
    %s25 = scalar_select %p22, %s23, %s24
    %p28 = pneg %p22
    %p29 = scmp.eq.s32.totalorder %s13, 1
    %p30 = por %p28, %p29
    %p31 = scmp.ne.s32.totalorder %s23, %s26
    %p32 = scmp.eq.s32.totalorder %s13, 0
    %p33 = por %p31, %p32
    %p34 = scmp.ne.s32.totalorder %s23, %s26
    %p35 = scmp.eq.s32.totalorder %s18, 1
    %p36 = por %p34, %p35
    %p37 = scmp.ne.s32.totalorder %s26, %s27
    %p38 = scmp.eq.s32.totalorder %s18, 0
    %p39 = por %p37, %p38
    %p40 = scmp.ne.s32.totalorder %s26, %s27
    %p41 = scmp.eq.s32.totalorder %s19, 1
    %p42 = por %p40, %p41
    %p44 = scmp.ne.s32.totalorder %s27, %s43
    %p45 = scmp.eq.s32.totalorder %s19, 0
    %p46 = por %p44, %p45
    %s47 = ssub.s32 %s13, %s20
    %p48 = scmp.eq.s32.totalorder %s47, 0
    %s50 = sadd.s32 %s49, 1
    %s51 = scalar_select %p48, %s49, %s50
    %p54 = pneg %p48
    %p55 = scmp.eq.s32.totalorder %s13, 1
    %p56 = por %p54, %p55
    %p57 = scmp.ne.s32.totalorder %s49, %s52
    %p58 = scmp.eq.s32.totalorder %s13, 0
    %p59 = por %p57, %p58
    %p60 = scmp.ne.s32.totalorder %s49, %s52
    %p61 = scmp.eq.s32.totalorder %s18, 1
    %p62 = por %p60, %p61
    %p63 = scmp.ne.s32.totalorder %s52, %s53
    %p64 = scmp.eq.s32.totalorder %s18, 0
    %p65 = por %p63, %p64
    %p66 = scmp.ne.s32.totalorder %s52, %s53
    %p67 = scmp.eq.s32.totalorder %s19, 1
    %p68 = por %p66, %p67
    %p70 = scmp.ne.s32.totalorder %s53, %s69
    %p71 = scmp.eq.s32.totalorder %s19, 0
    %p72 = por %p70, %p71
    %s73 = ssub.s32 %s13, %s20
    %p74 = scmp.eq.s32.totalorder %s73, 0
    %s76 = sadd.s32 %s75, 1
    %s77 = scalar_select %p74, %s75, %s76
    %p80 = pneg %p74
    %p81 = scmp.eq.s32.totalorder %s13, 1
    %p82 = por %p80, %p81
    %p83 = scmp.ne.s32.totalorder %s75, %s78
    %p84 = scmp.eq.s32.totalorder %s13, 0
    %p85 = por %p83, %p84
    %p86 = scmp.ne.s32.totalorder %s75, %s78
    %p87 = scmp.eq.s32.totalorder %s18, 1
    %p88 = por %p86, %p87
    %p89 = scmp.ne.s32.totalorder %s78, %s79
    %p90 = scmp.eq.s32.totalorder %s18, 0
    %p91 = por %p89, %p90
    %p92 = scmp.ne.s32.totalorder %s78, %s79
    %p93 = scmp.eq.s32.totalorder %s19, 1
    %p94 = por %p92, %p93
    %p96 = scmp.ne.s32.totalorder %s79, %s95
    %p97 = scmp.eq.s32.totalorder %s19, 0
    %p98 = por %p96, %p97
    %s99 = ssub.s32 %s13, %s20
    %p100 = scmp.eq.s32.totalorder %s99, 0
    %s102 = sadd.s32 %s101, 1
    %s103 = scalar_select %p100, %s101, %s102
    %p106 = pneg %p100
    %p107 = scmp.eq.s32.totalorder %s13, 1
    %p108 = por %p106, %p107
    %p109 = scmp.ne.s32.totalorder %s101, %s104
    %p110 = scmp.eq.s32.totalorder %s13, 0
    %p111 = por %p109, %p110
    %p112 = scmp.ne.s32.totalorder %s101, %s104
    %p113 = scmp.eq.s32.totalorder %s18, 1
    %p114 = por %p112, %p113
    %p115 = scmp.ne.s32.totalorder %s104, %s105
    %p116 = scmp.eq.s32.totalorder %s18, 0
    %p117 = por %p115, %p116
    %p118 = scmp.ne.s32.totalorder %s104, %s105
    %p119 = scmp.eq.s32.totalorder %s19, 1
    %p120 = por %p118, %p119
    %p122 = scmp.ne.s32.totalorder %s105, %s121
    %p123 = scmp.eq.s32.totalorder %s19, 0
    %p124 = por %p122, %p123
    %s126 = sadd.s32 %s125, 1
    %p129 = scmp.eq.s32.totalorder %s13, 1
    %p130 = scmp.ne.s32.totalorder %s125, %s127
    %p131 = scmp.eq.s32.totalorder %s13, 0
    %p132 = por %p130, %p131
    %p133 = scmp.ne.s32.totalorder %s125, %s127
    %p134 = scmp.eq.s32.totalorder %s18, 1
    %p135 = por %p133, %p134
    %p136 = scmp.ne.s32.totalorder %s127, %s128
    %p137 = scmp.eq.s32.totalorder %s18, 0
    %p138 = por %p136, %p137
    %p139 = scmp.ne.s32.totalorder %s127, %s128
    %p140 = scmp.eq.s32.totalorder %s19, 1
    %p141 = por %p139, %p140
    %p143 = scmp.ne.s32.totalorder %s128, %s142
    %p144 = scmp.eq.s32.totalorder %s19, 0
    %p145 = por %p143, %p144
    %s147 = sadd.s32 %s146, 1
    %p150 = scmp.eq.s32.totalorder %s13, 1
    %p151 = scmp.ne.s32.totalorder %s146, %s148
    %p152 = scmp.eq.s32.totalorder %s13, 0
    %p153 = por %p151, %p152
    %p154 = scmp.ne.s32.totalorder %s146, %s148
    %p155 = scmp.eq.s32.totalorder %s18, 1
    %p156 = por %p154, %p155
    %p157 = scmp.ne.s32.totalorder %s148, %s149
    %p158 = scmp.eq.s32.totalorder %s18, 0
    %p159 = por %p157, %p158
    %p160 = scmp.ne.s32.totalorder %s148, %s149
    %p161 = scmp.eq.s32.totalorder %s19, 1
    %p162 = por %p160, %p161
    %p164 = scmp.ne.s32.totalorder %s149, %s163
    %p165 = scmp.eq.s32.totalorder %s19, 0
    %p166 = por %p164, %p165
    %s168 = sadd.s32 %s167, 1
    %p171 = scmp.eq.s32.totalorder %s13, 1
    %p172 = scmp.ne.s32.totalorder %s167, %s169
    %p173 = scmp.eq.s32.totalorder %s13, 0
    %p174 = por %p172, %p173
    %p175 = scmp.ne.s32.totalorder %s167, %s169
    %p176 = scmp.eq.s32.totalorder %s18, 1
    %p177 = por %p175, %p176
    %p178 = scmp.ne.s32.totalorder %s169, %s170
    %p179 = scmp.eq.s32.totalorder %s18, 0
    %p180 = por %p178, %p179
    %p181 = scmp.ne.s32.totalorder %s169, %s170
    %p182 = scmp.eq.s32.totalorder %s19, 1
    %p183 = por %p181, %p182
    %p185 = scmp.ne.s32.totalorder %s170, %s184
    %p186 = scmp.eq.s32.totalorder %s19, 0
    %p187 = por %p185, %p186
    %s188 = ssub.s32 %s13, %s20
    %p189 = scmp.eq.s32.totalorder %s188, 0
    %s191 = sadd.s32 %s190, 1
    %s192 = scalar_select %p189, %s190, %s191
    %p195 = pneg %p189
    %p196 = scmp.eq.s32.totalorder %s13, 1
    %p197 = por %p195, %p196
    %p198 = scmp.ne.s32.totalorder %s190, %s193
    %p199 = scmp.eq.s32.totalorder %s13, 0
    %p200 = por %p198, %p199
    %p201 = scmp.ne.s32.totalorder %s190, %s193
    %p202 = scmp.eq.s32.totalorder %s18, 1
    %p203 = por %p201, %p202
    %p204 = scmp.ne.s32.totalorder %s193, %s194
    %p205 = scmp.eq.s32.totalorder %s18, 0
    %p206 = por %p204, %p205
    %p207 = scmp.ne.s32.totalorder %s193, %s194
    %p208 = scmp.eq.s32.totalorder %s19, 1
    %p209 = por %p207, %p208
    %p211 = scmp.ne.s32.totalorder %s194, %s210
    %p212 = scmp.eq.s32.totalorder %s19, 0
    %p213 = por %p211, %p212
    %p214 = scmp.le.s32.totalorder 1, %s13
    %p215 = scmp.lt.s32.totalorder %s13, 3
    %p216 = pnand %p214, %p215
    %p217 = pneg %p216
    // Predicated region
    $region9: #{segformer_head_forward.9} parent=5 // pred_check
      _
    $region10: #{segformer_head_forward.9} parent=5 // pred_check_branch
      %219 = sbr.rel (%p216) target = $region12
    $region11: #{segformer_head_forward.9} parent=5 // pred_region
      %s220 = ssub.s32 %s13, 1
      // Predicated region
      $region13: #{segformer_head_forward.9} parent=11 // pred_check
        %p221 = pneg %p138
      $region14: #{segformer_head_forward.9} parent=11 // pred_check_branch
        %223 = sbr.rel (%p221) target = $region16
      $region15: #{segformer_head_forward.9} parent=11 // pred_region
        _
      $region16: #{segformer_head_forward.9} parent=11 // pred_fallthru
        _
      // Predicated region
      $region17: #{segformer_head_forward.9} parent=11 // pred_check
        %p224 = pneg %p159
      $region18: #{segformer_head_forward.9} parent=11 // pred_check_branch
        %226 = sbr.rel (%p224) target = $region20
      $region19: #{segformer_head_forward.9} parent=11 // pred_region
        _
      $region20: #{segformer_head_forward.9} parent=11 // pred_fallthru
        _
      // Predicated region
      $region21: #{segformer_head_forward.9} parent=11 // pred_check
        %p227 = pneg %p180
      $region22: #{segformer_head_forward.9} parent=11 // pred_check_branch
        %229 = sbr.rel (%p227) target = $region24
      $region23: #{segformer_head_forward.9} parent=11 // pred_region
        _
      $region24: #{segformer_head_forward.9} parent=11 // pred_fallthru
        _
    $region12: #{segformer_head_forward.9} parent=5 // pred_fallthru
      _
    %p230 = scmp.lt.s32.totalorder %s13, 2
    // Predicated region
    $region25: #{segformer_head_forward.9} parent=5 // pred_check
      %p231 = pneg %p230
    $region26: #{segformer_head_forward.9} parent=5 // pred_check_branch
      %233 = sbr.rel (%p231) target = $region28
    $region27: #{segformer_head_forward.9} parent=5 // pred_region
      // Predicated region
      $region29: #{segformer_head_forward.9} parent=27 // pred_check
        %p234 = pneg %p33
      $region30: #{segformer_head_forward.9} parent=27 // pred_check_branch
        %236 = sbr.rel (%p234) target = $region32
      $region31: #{segformer_head_forward.9} parent=27 // pred_region
        %s237 = smul.u32 32, %s13
        %p238 = scmp.lt.s32.totalorder %s237, 63
        %s239 = scalar_select %p238, %s237, 63
        %s240 = smul.addr %s239, 4
        %s241 = scalar_lea.vmem %s0, %s240
        %s242 = smul.u32 32, %s13
      $region32: #{segformer_head_forward.9} parent=27 // pred_fallthru
        _
      // Predicated region
      $region33: #{segformer_head_forward.9} parent=27 // pred_check
        %p243 = pneg %p59
      $region34: #{segformer_head_forward.9} parent=27 // pred_check_branch
        %245 = sbr.rel (%p243) target = $region36
      $region35: #{segformer_head_forward.9} parent=27 // pred_region
        %s246 = smul.u32 32, %s13
        %p247 = scmp.lt.s32.totalorder %s246, 63
        %s248 = scalar_select %p247, %s246, 63
        %s249 = smul.addr %s248, 4
        %s250 = scalar_lea.vmem %s1, %s249
        %s251 = smul.u32 32, %s13
      $region36: #{segformer_head_forward.9} parent=27 // pred_fallthru
        _
      // Predicated region
      $region37: #{segformer_head_forward.9} parent=27 // pred_check
        %p252 = pneg %p85
      $region38: #{segformer_head_forward.9} parent=27 // pred_check_branch
        %254 = sbr.rel (%p252) target = $region40
      $region39: #{segformer_head_forward.9} parent=27 // pred_region
        %s255 = smul.u32 32, %s13
        %p256 = scmp.lt.s32.totalorder %s255, 63
        %s257 = scalar_select %p256, %s255, 63
        %s258 = smul.addr %s257, 4
        %s259 = scalar_lea.vmem %s2, %s258
        %s260 = smul.u32 32, %s13
      $region40: #{segformer_head_forward.9} parent=27 // pred_fallthru
        _
      // Predicated region
      $region41: #{segformer_head_forward.9} parent=27 // pred_check
        %p261 = pneg %p111
      $region42: #{segformer_head_forward.9} parent=27 // pred_check_branch
        %263 = sbr.rel (%p261) target = $region44
      $region43: #{segformer_head_forward.9} parent=27 // pred_region
        %s264 = smul.u32 32, %s13
        %p265 = scmp.lt.s32.totalorder %s264, 63
        %s266 = scalar_select %p265, %s264, 63
        %s267 = smul.addr %s266, 4
        %s268 = scalar_lea.vmem %s3, %s267
        %s269 = smul.u32 32, %s13
      $region44: #{segformer_head_forward.9} parent=27 // pred_fallthru
        _
    $region28: #{segformer_head_forward.9} parent=5 // pred_fallthru
      _
    %p270 = scmp.le.s32.totalorder 1, %s13
    %p271 = scmp.lt.s32.totalorder %s13, 3
    %p272 = pnand %p270, %p271
    %p273 = pneg %p272
    // Predicated region
    $region45: #{segformer_head_forward.9} parent=5 // pred_check
      _
    $region46: #{segformer_head_forward.9} parent=5 // pred_check_branch
      %275 = sbr.rel (%p272) target = $region48
    $region47: #{segformer_head_forward.9} parent=5 // pred_region
      %s276 = ssub.s32 %s13, 1
      %s277 = smul.u32 32, %s18
      %p278 = scmp.lt.s32.totalorder %s277, 63
      %s279 = scalar_select %p278, %s277, 63
      %s280 = smul.addr %s279, 4
      %s281 = scalar_lea.vmem %s0, %s280
      %p282 = pneg %p39
      %p283 = pneg %p36
      %s284 = smul.u32 32, %s18
      %p285 = scmp.lt.s32.totalorder %s284, 63
      %s286 = scalar_select %p285, %s284, 63
      %s287 = smul.addr %s286, 4
      %s288 = scalar_lea.vmem %s1, %s287
      %p289 = pneg %p65
      %p290 = pneg %p62
      %s291 = smul.u32 32, %s18
      %p292 = scmp.lt.s32.totalorder %s291, 63
      %s293 = scalar_select %p292, %s291, 63
      %s294 = smul.addr %s293, 4
      %s295 = scalar_lea.vmem %s2, %s294
      %p296 = pneg %p91
      %p297 = pneg %p88
      %s298 = smul.u32 32, %s18
      %p299 = scmp.lt.s32.totalorder %s298, 63
      %s300 = scalar_select %p299, %s298, 63
      %s301 = smul.addr %s300, 4
      %s302 = scalar_lea.vmem %s3, %s301
      %p303 = pneg %p117
      %p304 = pneg %p114
      %p305 = pneg %p138
      %p306 = pneg %p135
      %p307 = pneg %p159
      %p308 = pneg %p156
      %p309 = pneg %p180
      %p310 = pneg %p177
      %p311 = pneg %p206
      %p312 = pneg %p203
      %s313 = smul.u32 32, %s18
      %p314 = scmp.lt.s32.totalorder %s313, 63
      %s315 = scalar_select %p314, %s313, 63
      %s316 = smul.addr %s315, 8
      %s317 = scalar_lea.vmem %s7, %s316
      %s318 = smul.u32 32, %s18
      %p319 = scmp.lt.s32.totalorder %s318, 63
      %s320 = scalar_select %p319, %s318, 63
      %s321 = smul.addr %s320, 4
      %s322 = scalar_lea.vmem %s0, %s321
      %s323 = smul.u32 32, %s18
      %s324 = smul.u32 32, %s18
      %p325 = scmp.lt.s32.totalorder %s324, 63
      %s326 = scalar_select %p325, %s324, 63
      %s327 = smul.addr %s326, 4
      %s328 = scalar_lea.vmem %s1, %s327
      %s329 = smul.u32 32, %s18
      %s330 = smul.u32 32, %s18
      %p331 = scmp.lt.s32.totalorder %s330, 63
      %s332 = scalar_select %p331, %s330, 63
      %s333 = smul.addr %s332, 4
      %s334 = scalar_lea.vmem %s2, %s333
      %s335 = smul.u32 32, %s18
      %s336 = smul.u32 32, %s18
      %p337 = scmp.lt.s32.totalorder %s336, 63
      %s338 = scalar_select %p337, %s336, 63
      %s339 = smul.addr %s338, 4
      %s340 = scalar_lea.vmem %s3, %s339
      %s341 = smul.u32 32, %s18
      %s342 = smul.u32 32, %s18
      %p343 = scmp.lt.s32.totalorder %s342, 63
      %s344 = scalar_select %p343, %s342, 63
      %s345 = smul.addr %s344, 8
      %s346 = scalar_lea.vmem %s7, %s345
      %s347 = smul.u32 32, %s18
      %v349 = vld [vmem:[%s322] sm:$0xf]
      %v350 = vld [vmem:[%s322 + $0x4] sm:$0xf]
      %v351 = vld [vmem:[%s322 + $0x8] sm:$0xf]
      %v352 = vld [vmem:[%s322 + $0xc] sm:$0xf]
      %v353 = vld [vmem:[%s322 + $0x10] sm:$0xf]
      %v354 = vld [vmem:[%s322 + $0x14] sm:$0xf]
      %v355 = vld [vmem:[%s322 + $0x18] sm:$0xf]
      %v356 = vld [vmem:[%s322 + $0x1c] sm:$0xf]
      %v357 = vld [vmem:[%s322 + $0x20] sm:$0xf]
      %v358 = vld [vmem:[%s322 + $0x24] sm:$0xf]
      %v359 = vld [vmem:[%s322 + $0x28] sm:$0xf]
      %v360 = vld [vmem:[%s322 + $0x2c] sm:$0xf]
      %v361 = vld [vmem:[%s322 + $0x30] sm:$0xf]
      %v362 = vld [vmem:[%s322 + $0x34] sm:$0xf]
      %v363 = vld [vmem:[%s322 + $0x38] sm:$0xf]
      %v364 = vld [vmem:[%s322 + $0x3c] sm:$0xf]
      %v365 = vld [vmem:[%s322 + $0x40] sm:$0xf]
      %v366 = vld [vmem:[%s322 + $0x44] sm:$0xf]
      %v367 = vld [vmem:[%s322 + $0x48] sm:$0xf]
      %v368 = vld [vmem:[%s322 + $0x4c] sm:$0xf]
      %v369 = vld [vmem:[%s322 + $0x50] sm:$0xf]
      %v370 = vld [vmem:[%s322 + $0x54] sm:$0xf]
      %v371 = vld [vmem:[%s322 + $0x58] sm:$0xf]
      %v372 = vld [vmem:[%s322 + $0x5c] sm:$0xf]
      %v373 = vld [vmem:[%s322 + $0x60] sm:$0xf]
      %v374 = vld [vmem:[%s322 + $0x64] sm:$0xf]
      %v375 = vld [vmem:[%s322 + $0x68] sm:$0xf]
      %v376 = vld [vmem:[%s322 + $0x6c] sm:$0xf]
      %v377 = vld [vmem:[%s322 + $0x70] sm:$0xf]
      %v378 = vld [vmem:[%s322 + $0x74] sm:$0xf]
      %v379 = vld [vmem:[%s322 + $0x78] sm:$0xf]
      %v380 = vld [vmem:[%s322 + $0x7c] sm:$0xf]
      %v381 = vunpack.c.l.bf16 %v349
      %v382 = vunpack.c.l.bf16 %v350
      %v383 = vunpack.c.l.bf16 %v351
      %v384 = vunpack.c.l.bf16 %v352
      %v385 = vunpack.c.l.bf16 %v353
      %v386 = vunpack.c.l.bf16 %v354
      %v387 = vunpack.c.l.bf16 %v355
      %v388 = vunpack.c.l.bf16 %v356
      %v389 = vunpack.c.l.bf16 %v357
      %v390 = vunpack.c.l.bf16 %v358
      %v391 = vunpack.c.l.bf16 %v359
      %v392 = vunpack.c.l.bf16 %v360
      %v393 = vunpack.c.l.bf16 %v361
      %v394 = vunpack.c.l.bf16 %v362
      %v395 = vunpack.c.l.bf16 %v363
      %v396 = vunpack.c.l.bf16 %v364
      %v397 = vunpack.c.l.bf16 %v365
      %v398 = vunpack.c.l.bf16 %v366
      %v399 = vunpack.c.l.bf16 %v367
      %v400 = vunpack.c.l.bf16 %v368
      %v401 = vunpack.c.l.bf16 %v369
      %v402 = vunpack.c.l.bf16 %v370
      %v403 = vunpack.c.l.bf16 %v371
      %v404 = vunpack.c.l.bf16 %v372
      %v405 = vunpack.c.l.bf16 %v373
      %v406 = vunpack.c.l.bf16 %v374
      %v407 = vunpack.c.l.bf16 %v375
      %v408 = vunpack.c.l.bf16 %v376
      %v409 = vunpack.c.l.bf16 %v377
      %v410 = vunpack.c.l.bf16 %v378
      %v411 = vunpack.c.l.bf16 %v379
      %v412 = vunpack.c.l.bf16 %v380
      %v413 = vld [vmem:[%s328] sm:$0xf]
      %v414 = vld [vmem:[%s328 + $0x4] sm:$0xf]
      %v415 = vld [vmem:[%s328 + $0x8] sm:$0xf]
      %v416 = vld [vmem:[%s328 + $0xc] sm:$0xf]
      %v417 = vld [vmem:[%s328 + $0x10] sm:$0xf]
      %v418 = vld [vmem:[%s328 + $0x14] sm:$0xf]
      %v419 = vld [vmem:[%s328 + $0x18] sm:$0xf]
      %v420 = vld [vmem:[%s328 + $0x1c] sm:$0xf]
      %v421 = vld [vmem:[%s328 + $0x20] sm:$0xf]
      %v422 = vld [vmem:[%s328 + $0x24] sm:$0xf]
      %v423 = vld [vmem:[%s328 + $0x28] sm:$0xf]
      %v424 = vld [vmem:[%s328 + $0x2c] sm:$0xf]
      %v425 = vld [vmem:[%s328 + $0x30] sm:$0xf]
      %v426 = vld [vmem:[%s328 + $0x34] sm:$0xf]
      %v427 = vld [vmem:[%s328 + $0x38] sm:$0xf]
      %v428 = vld [vmem:[%s328 + $0x3c] sm:$0xf]
      %v429 = vld [vmem:[%s328 + $0x40] sm:$0xf]
      %v430 = vld [vmem:[%s328 + $0x44] sm:$0xf]
      %v431 = vld [vmem:[%s328 + $0x48] sm:$0xf]
      %v432 = vld [vmem:[%s328 + $0x4c] sm:$0xf]
      %v433 = vld [vmem:[%s328 + $0x50] sm:$0xf]
      %v434 = vld [vmem:[%s328 + $0x54] sm:$0xf]
      %v435 = vld [vmem:[%s328 + $0x58] sm:$0xf]
      %v436 = vld [vmem:[%s328 + $0x5c] sm:$0xf]
      %v437 = vld [vmem:[%s328 + $0x60] sm:$0xf]
      %v438 = vld [vmem:[%s328 + $0x64] sm:$0xf]
      %v439 = vld [vmem:[%s328 + $0x68] sm:$0xf]
      %v440 = vld [vmem:[%s328 + $0x6c] sm:$0xf]
      %v441 = vld [vmem:[%s328 + $0x70] sm:$0xf]
      %v442 = vld [vmem:[%s328 + $0x74] sm:$0xf]
      %v443 = vld [vmem:[%s328 + $0x78] sm:$0xf]
      %v444 = vld [vmem:[%s328 + $0x7c] sm:$0xf]
      %v445 = vunpack.c.l.bf16 %v413
      %v446 = vunpack.c.l.bf16 %v414
      %v447 = vunpack.c.l.bf16 %v415
      %v448 = vunpack.c.l.bf16 %v416
      %v449 = vunpack.c.l.bf16 %v417
      %v450 = vunpack.c.l.bf16 %v418
      %v451 = vunpack.c.l.bf16 %v419
      %v452 = vunpack.c.l.bf16 %v420
      %v453 = vunpack.c.l.bf16 %v421
      %v454 = vunpack.c.l.bf16 %v422
      %v455 = vunpack.c.l.bf16 %v423
      %v456 = vunpack.c.l.bf16 %v424
      %v457 = vunpack.c.l.bf16 %v425
      %v458 = vunpack.c.l.bf16 %v426
      %v459 = vunpack.c.l.bf16 %v427
      %v460 = vunpack.c.l.bf16 %v428
      %v461 = vunpack.c.l.bf16 %v429
      %v462 = vunpack.c.l.bf16 %v430
      %v463 = vunpack.c.l.bf16 %v431
      %v464 = vunpack.c.l.bf16 %v432
      %v465 = vunpack.c.l.bf16 %v433
      %v466 = vunpack.c.l.bf16 %v434
      %v467 = vunpack.c.l.bf16 %v435
      %v468 = vunpack.c.l.bf16 %v436
      %v469 = vunpack.c.l.bf16 %v437
      %v470 = vunpack.c.l.bf16 %v438
      %v471 = vunpack.c.l.bf16 %v439
      %v472 = vunpack.c.l.bf16 %v440
      %v473 = vunpack.c.l.bf16 %v441
      %v474 = vunpack.c.l.bf16 %v442
      %v475 = vunpack.c.l.bf16 %v443
      %v476 = vunpack.c.l.bf16 %v444
      %v477 = vadd.f32 %v381, %v445
      %v478 = vadd.f32 %v382, %v446
      %v479 = vadd.f32 %v383, %v447
      %v480 = vadd.f32 %v384, %v448
      %v481 = vadd.f32 %v385, %v449
      %v482 = vadd.f32 %v386, %v450
      %v483 = vadd.f32 %v387, %v451
      %v484 = vadd.f32 %v388, %v452
      %v485 = vadd.f32 %v389, %v453
      %v486 = vadd.f32 %v390, %v454
      %v487 = vadd.f32 %v391, %v455
      %v488 = vadd.f32 %v392, %v456
      %v489 = vadd.f32 %v393, %v457
      %v490 = vadd.f32 %v394, %v458
      %v491 = vadd.f32 %v395, %v459
      %v492 = vadd.f32 %v396, %v460
      %v493 = vadd.f32 %v397, %v461
      %v494 = vadd.f32 %v398, %v462
      %v495 = vadd.f32 %v399, %v463
      %v496 = vadd.f32 %v400, %v464
      %v497 = vadd.f32 %v401, %v465
      %v498 = vadd.f32 %v402, %v466
      %v499 = vadd.f32 %v403, %v467
      %v500 = vadd.f32 %v404, %v468
      %v501 = vadd.f32 %v405, %v469
      %v502 = vadd.f32 %v406, %v470
      %v503 = vadd.f32 %v407, %v471
      %v504 = vadd.f32 %v408, %v472
      %v505 = vadd.f32 %v409, %v473
      %v506 = vadd.f32 %v410, %v474
      %v507 = vadd.f32 %v411, %v475
      %v508 = vadd.f32 %v412, %v476
      %v509 = vld [vmem:[%s334] sm:$0xf]
      %v510 = vld [vmem:[%s334 + $0x4] sm:$0xf]
      %v511 = vld [vmem:[%s334 + $0x8] sm:$0xf]
      %v512 = vld [vmem:[%s334 + $0xc] sm:$0xf]
      %v513 = vld [vmem:[%s334 + $0x10] sm:$0xf]
      %v514 = vld [vmem:[%s334 + $0x14] sm:$0xf]
      %v515 = vld [vmem:[%s334 + $0x18] sm:$0xf]
      %v516 = vld [vmem:[%s334 + $0x1c] sm:$0xf]
      %v517 = vld [vmem:[%s334 + $0x20] sm:$0xf]
      %v518 = vld [vmem:[%s334 + $0x24] sm:$0xf]
      %v519 = vld [vmem:[%s334 + $0x28] sm:$0xf]
      %v520 = vld [vmem:[%s334 + $0x2c] sm:$0xf]
      %v521 = vld [vmem:[%s334 + $0x30] sm:$0xf]
      %v522 = vld [vmem:[%s334 + $0x34] sm:$0xf]
      %v523 = vld [vmem:[%s334 + $0x38] sm:$0xf]
      %v524 = vld [vmem:[%s334 + $0x3c] sm:$0xf]
      %v525 = vld [vmem:[%s334 + $0x40] sm:$0xf]
      %v526 = vld [vmem:[%s334 + $0x44] sm:$0xf]
      %v527 = vld [vmem:[%s334 + $0x48] sm:$0xf]
      %v528 = vld [vmem:[%s334 + $0x4c] sm:$0xf]
      %v529 = vld [vmem:[%s334 + $0x50] sm:$0xf]
      %v530 = vld [vmem:[%s334 + $0x54] sm:$0xf]
      %v531 = vld [vmem:[%s334 + $0x58] sm:$0xf]
      %v532 = vld [vmem:[%s334 + $0x5c] sm:$0xf]
      %v533 = vld [vmem:[%s334 + $0x60] sm:$0xf]
      %v534 = vld [vmem:[%s334 + $0x64] sm:$0xf]
      %v535 = vld [vmem:[%s334 + $0x68] sm:$0xf]
      %v536 = vld [vmem:[%s334 + $0x6c] sm:$0xf]
      %v537 = vld [vmem:[%s334 + $0x70] sm:$0xf]
      %v538 = vld [vmem:[%s334 + $0x74] sm:$0xf]
      %v539 = vld [vmem:[%s334 + $0x78] sm:$0xf]
      %v540 = vld [vmem:[%s334 + $0x7c] sm:$0xf]
      %v541 = vunpack.c.l.bf16 %v509
      %v542 = vunpack.c.l.bf16 %v510
      %v543 = vunpack.c.l.bf16 %v511
      %v544 = vunpack.c.l.bf16 %v512
      %v545 = vunpack.c.l.bf16 %v513
      %v546 = vunpack.c.l.bf16 %v514
      %v547 = vunpack.c.l.bf16 %v515
      %v548 = vunpack.c.l.bf16 %v516
      %v549 = vunpack.c.l.bf16 %v517
      %v550 = vunpack.c.l.bf16 %v518
      %v551 = vunpack.c.l.bf16 %v519
      %v552 = vunpack.c.l.bf16 %v520
      %v553 = vunpack.c.l.bf16 %v521
      %v554 = vunpack.c.l.bf16 %v522
      %v555 = vunpack.c.l.bf16 %v523
      %v556 = vunpack.c.l.bf16 %v524
      %v557 = vunpack.c.l.bf16 %v525
      %v558 = vunpack.c.l.bf16 %v526
      %v559 = vunpack.c.l.bf16 %v527
      %v560 = vunpack.c.l.bf16 %v528
      %v561 = vunpack.c.l.bf16 %v529
      %v562 = vunpack.c.l.bf16 %v530
      %v563 = vunpack.c.l.bf16 %v531
      %v564 = vunpack.c.l.bf16 %v532
      %v565 = vunpack.c.l.bf16 %v533
      %v566 = vunpack.c.l.bf16 %v534
      %v567 = vunpack.c.l.bf16 %v535
      %v568 = vunpack.c.l.bf16 %v536
      %v569 = vunpack.c.l.bf16 %v537
      %v570 = vunpack.c.l.bf16 %v538
      %v571 = vunpack.c.l.bf16 %v539
      %v572 = vunpack.c.l.bf16 %v540
      %v573 = vadd.f32 %v477, %v541
      %v574 = vadd.f32 %v478, %v542
      %v575 = vadd.f32 %v479, %v543
      %v576 = vadd.f32 %v480, %v544
      %v577 = vadd.f32 %v481, %v545
      %v578 = vadd.f32 %v482, %v546
      %v579 = vadd.f32 %v483, %v547
      %v580 = vadd.f32 %v484, %v548
      %v581 = vadd.f32 %v485, %v549
      %v582 = vadd.f32 %v486, %v550
      %v583 = vadd.f32 %v487, %v551
      %v584 = vadd.f32 %v488, %v552
      %v585 = vadd.f32 %v489, %v553
      %v586 = vadd.f32 %v490, %v554
      %v587 = vadd.f32 %v491, %v555
      %v588 = vadd.f32 %v492, %v556
      %v589 = vadd.f32 %v493, %v557
      %v590 = vadd.f32 %v494, %v558
      %v591 = vadd.f32 %v495, %v559
      %v592 = vadd.f32 %v496, %v560
      %v593 = vadd.f32 %v497, %v561
      %v594 = vadd.f32 %v498, %v562
      %v595 = vadd.f32 %v499, %v563
      %v596 = vadd.f32 %v500, %v564
      %v597 = vadd.f32 %v501, %v565
      %v598 = vadd.f32 %v502, %v566
      %v599 = vadd.f32 %v503, %v567
      %v600 = vadd.f32 %v504, %v568
      %v601 = vadd.f32 %v505, %v569
      %v602 = vadd.f32 %v506, %v570
      %v603 = vadd.f32 %v507, %v571
      %v604 = vadd.f32 %v508, %v572
      %v605 = vld [vmem:[%s340] sm:$0xf]
      %v606 = vld [vmem:[%s340 + $0x4] sm:$0xf]
      %v607 = vld [vmem:[%s340 + $0x8] sm:$0xf]
      %v608 = vld [vmem:[%s340 + $0xc] sm:$0xf]
      %v609 = vld [vmem:[%s340 + $0x10] sm:$0xf]
      %v610 = vld [vmem:[%s340 + $0x14] sm:$0xf]
      %v611 = vld [vmem:[%s340 + $0x18] sm:$0xf]
      %v612 = vld [vmem:[%s340 + $0x1c] sm:$0xf]
      %v613 = vld [vmem:[%s340 + $0x20] sm:$0xf]
      %v614 = vld [vmem:[%s340 + $0x24] sm:$0xf]
      %v615 = vld [vmem:[%s340 + $0x28] sm:$0xf]
      %v616 = vld [vmem:[%s340 + $0x2c] sm:$0xf]
      %v617 = vld [vmem:[%s340 + $0x30] sm:$0xf]
      %v618 = vld [vmem:[%s340 + $0x34] sm:$0xf]
      %v619 = vld [vmem:[%s340 + $0x38] sm:$0xf]
      %v620 = vld [vmem:[%s340 + $0x3c] sm:$0xf]
      %v621 = vld [vmem:[%s340 + $0x40] sm:$0xf]
      %v622 = vld [vmem:[%s340 + $0x44] sm:$0xf]
      %v623 = vld [vmem:[%s340 + $0x48] sm:$0xf]
      %v624 = vld [vmem:[%s340 + $0x4c] sm:$0xf]
      %v625 = vld [vmem:[%s340 + $0x50] sm:$0xf]
      %v626 = vld [vmem:[%s340 + $0x54] sm:$0xf]
      %v627 = vld [vmem:[%s340 + $0x58] sm:$0xf]
      %v628 = vld [vmem:[%s340 + $0x5c] sm:$0xf]
      %v629 = vld [vmem:[%s340 + $0x60] sm:$0xf]
      %v630 = vld [vmem:[%s340 + $0x64] sm:$0xf]
      %v631 = vld [vmem:[%s340 + $0x68] sm:$0xf]
      %v632 = vld [vmem:[%s340 + $0x6c] sm:$0xf]
      %v633 = vld [vmem:[%s340 + $0x70] sm:$0xf]
      %v634 = vld [vmem:[%s340 + $0x74] sm:$0xf]
      %v635 = vld [vmem:[%s340 + $0x78] sm:$0xf]
      %v636 = vld [vmem:[%s340 + $0x7c] sm:$0xf]
      %v637 = vunpack.c.l.bf16 %v605
      %v638 = vunpack.c.l.bf16 %v606
      %v639 = vunpack.c.l.bf16 %v607
      %v640 = vunpack.c.l.bf16 %v608
      %v641 = vunpack.c.l.bf16 %v609
      %v642 = vunpack.c.l.bf16 %v610
      %v643 = vunpack.c.l.bf16 %v611
      %v644 = vunpack.c.l.bf16 %v612
      %v645 = vunpack.c.l.bf16 %v613
      %v646 = vunpack.c.l.bf16 %v614
      %v647 = vunpack.c.l.bf16 %v615
      %v648 = vunpack.c.l.bf16 %v616
      %v649 = vunpack.c.l.bf16 %v617
      %v650 = vunpack.c.l.bf16 %v618
      %v651 = vunpack.c.l.bf16 %v619
      %v652 = vunpack.c.l.bf16 %v620
      %v653 = vunpack.c.l.bf16 %v621
      %v654 = vunpack.c.l.bf16 %v622
      %v655 = vunpack.c.l.bf16 %v623
      %v656 = vunpack.c.l.bf16 %v624
      %v657 = vunpack.c.l.bf16 %v625
      %v658 = vunpack.c.l.bf16 %v626
      %v659 = vunpack.c.l.bf16 %v627
      %v660 = vunpack.c.l.bf16 %v628
      %v661 = vunpack.c.l.bf16 %v629
      %v662 = vunpack.c.l.bf16 %v630
      %v663 = vunpack.c.l.bf16 %v631
      %v664 = vunpack.c.l.bf16 %v632
      %v665 = vunpack.c.l.bf16 %v633
      %v666 = vunpack.c.l.bf16 %v634
      %v667 = vunpack.c.l.bf16 %v635
      %v668 = vunpack.c.l.bf16 %v636
      %v669 = vadd.f32 %v573, %v637
      %v670 = vadd.f32 %v574, %v638
      %v671 = vadd.f32 %v575, %v639
      %v672 = vadd.f32 %v576, %v640
      %v673 = vadd.f32 %v577, %v641
      %v674 = vadd.f32 %v578, %v642
      %v675 = vadd.f32 %v579, %v643
      %v676 = vadd.f32 %v580, %v644
      %v677 = vadd.f32 %v581, %v645
      %v678 = vadd.f32 %v582, %v646
      %v679 = vadd.f32 %v583, %v647
      %v680 = vadd.f32 %v584, %v648
      %v681 = vadd.f32 %v585, %v649
      %v682 = vadd.f32 %v586, %v650
      %v683 = vadd.f32 %v587, %v651
      %v684 = vadd.f32 %v588, %v652
      %v685 = vadd.f32 %v589, %v653
      %v686 = vadd.f32 %v590, %v654
      %v687 = vadd.f32 %v591, %v655
      %v688 = vadd.f32 %v592, %v656
      %v689 = vadd.f32 %v593, %v657
      %v690 = vadd.f32 %v594, %v658
      %v691 = vadd.f32 %v595, %v659
      %v692 = vadd.f32 %v596, %v660
      %v693 = vadd.f32 %v597, %v661
      %v694 = vadd.f32 %v598, %v662
      %v695 = vadd.f32 %v599, %v663
      %v696 = vadd.f32 %v600, %v664
      %v697 = vadd.f32 %v601, %v665
      %v698 = vadd.f32 %v602, %v666
      %v699 = vadd.f32 %v603, %v667
      %v700 = vadd.f32 %v604, %v668
      %v701 = vld [vmem:[%s4] sm:$0x1]
      %v703 = vlaneseq
      %v704 = vshrl.u32 %v703, 7
      %v705 = vsub.s32 0, %v704
      %v706 = vrot.slane %v701, %v705
      %v708 = vadd.f32 %v669, %v706
      %v709 = vadd.f32 %v670, %v706
      %v710 = vadd.f32 %v671, %v706
      %v711 = vadd.f32 %v672, %v706
      %v712 = vadd.f32 %v673, %v706
      %v713 = vadd.f32 %v674, %v706
      %v714 = vadd.f32 %v675, %v706
      %v715 = vadd.f32 %v676, %v706
      %v716 = vadd.f32 %v677, %v706
      %v717 = vadd.f32 %v678, %v706
      %v718 = vadd.f32 %v679, %v706
      %v719 = vadd.f32 %v680, %v706
      %v720 = vadd.f32 %v681, %v706
      %v721 = vadd.f32 %v682, %v706
      %v722 = vadd.f32 %v683, %v706
      %v723 = vadd.f32 %v684, %v706
      %v724 = vadd.f32 %v685, %v706
      %v725 = vadd.f32 %v686, %v706
      %v726 = vadd.f32 %v687, %v706
      %v727 = vadd.f32 %v688, %v706
      %v728 = vadd.f32 %v689, %v706
      %v729 = vadd.f32 %v690, %v706
      %v730 = vadd.f32 %v691, %v706
      %v731 = vadd.f32 %v692, %v706
      %v732 = vadd.f32 %v693, %v706
      %v733 = vadd.f32 %v694, %v706
      %v734 = vadd.f32 %v695, %v706
      %v735 = vadd.f32 %v696, %v706
      %v736 = vadd.f32 %v697, %v706
      %v737 = vadd.f32 %v698, %v706
      %v738 = vadd.f32 %v699, %v706
      %v739 = vadd.f32 %v700, %v706
      %v740 = vmax.f32 %v708, 0.0
      %v741 = vmax.f32 %v709, 0.0
      %v742 = vmax.f32 %v710, 0.0
      %v743 = vmax.f32 %v711, 0.0
      %v744 = vmax.f32 %v712, 0.0
      %v745 = vmax.f32 %v713, 0.0
      %v746 = vmax.f32 %v714, 0.0
      %v747 = vmax.f32 %v715, 0.0
      %v748 = vmax.f32 %v716, 0.0
      %v749 = vmax.f32 %v717, 0.0
      %v750 = vmax.f32 %v718, 0.0
      %v751 = vmax.f32 %v719, 0.0
      %v752 = vmax.f32 %v720, 0.0
      %v753 = vmax.f32 %v721, 0.0
      %v754 = vmax.f32 %v722, 0.0
      %v755 = vmax.f32 %v723, 0.0
      %v756 = vmax.f32 %v724, 0.0
      %v757 = vmax.f32 %v725, 0.0
      %v758 = vmax.f32 %v726, 0.0
      %v759 = vmax.f32 %v727, 0.0
      %v760 = vmax.f32 %v728, 0.0
      %v761 = vmax.f32 %v729, 0.0
      %v762 = vmax.f32 %v730, 0.0
      %v763 = vmax.f32 %v731, 0.0
      %v764 = vmax.f32 %v732, 0.0
      %v765 = vmax.f32 %v733, 0.0
      %v766 = vmax.f32 %v734, 0.0
      %v767 = vmax.f32 %v735, 0.0
      %v768 = vmax.f32 %v736, 0.0
      %v769 = vmax.f32 %v737, 0.0
      %v770 = vmax.f32 %v738, 0.0
      %v771 = vmax.f32 %v739, 0.0
      %v772 = vpack.c.bf16 %v741, %v740
      %v773 = vpack.c.bf16 %v743, %v742
      %v774 = vpack.c.bf16 %v745, %v744
      %v775 = vpack.c.bf16 %v747, %v746
      %v776 = vpack.c.bf16 %v749, %v748
      %v777 = vpack.c.bf16 %v751, %v750
      %v778 = vpack.c.bf16 %v753, %v752
      %v779 = vpack.c.bf16 %v755, %v754
      %v780 = vpack.c.bf16 %v757, %v756
      %v781 = vpack.c.bf16 %v759, %v758
      %v782 = vpack.c.bf16 %v761, %v760
      %v783 = vpack.c.bf16 %v763, %v762
      %v784 = vpack.c.bf16 %v765, %v764
      %v785 = vpack.c.bf16 %v767, %v766
      %v786 = vpack.c.bf16 %v769, %v768
      %v787 = vpack.c.bf16 %v771, %v770
      %v788 = vld [vmem:[%s5] sm:$0xf]
      %v789 = vld [vmem:[%s5 + $0x4] sm:$0xf]
      %v790 = vld [vmem:[%s5 + $0x8] sm:$0xf]
      %v791 = vld [vmem:[%s5 + $0xc] sm:$0xf]
      %v792 = vld [vmem:[%s5 + $0x10] sm:$0xf]
      %v793 = vld [vmem:[%s5 + $0x14] sm:$0xf]
      %v794 = vld [vmem:[%s5 + $0x18] sm:$0xf]
      %v795 = vld [vmem:[%s5 + $0x1c] sm:$0xf]
      %v796 = vld [vmem:[%s5 + $0x20] sm:$0xf]
      %v797 = vld [vmem:[%s5 + $0x24] sm:$0xf]
      %v798 = vld [vmem:[%s5 + $0x28] sm:$0xf]
      %v799 = vld [vmem:[%s5 + $0x2c] sm:$0xf]
      %v800 = vld [vmem:[%s5 + $0x30] sm:$0xf]
      %v801 = vld [vmem:[%s5 + $0x34] sm:$0xf]
      %v802 = vld [vmem:[%s5 + $0x38] sm:$0xf]
      %v803 = vld [vmem:[%s5 + $0x3c] sm:$0xf]
      %v804 = vld [vmem:[%s6] sm:$0x1]
      %v806 = vlaneseq
      %v807 = vshrl.u32 %v806, 7
      %v808 = vsub.s32 0, %v807
      %v809 = vrot.slane %v804, %v808
      %v827 = vunpack.c.l.b16 %v788
      %v828 = vunpack.c.l.b16 %v789
      %v829 = vunpack.c.l.b16 %v790
      %v830 = vunpack.c.l.b16 %v791
      %v831 = vunpack.c.l.b16 %v792
      %v832 = vunpack.c.l.b16 %v793
      %v833 = vunpack.c.l.b16 %v794
      %v834 = vunpack.c.l.b16 %v795
      %v835 = vunpack.c.l.b16 %v796
      %v836 = vunpack.c.l.b16 %v797
      %v837 = vunpack.c.l.b16 %v798
      %v838 = vunpack.c.l.b16 %v799
      %v839 = vunpack.c.l.b16 %v800
      %v840 = vunpack.c.l.b16 %v801
      %v841 = vunpack.c.l.b16 %v802
      %v842 = vunpack.c.l.b16 %v803
      %v843 = vpack.c.b16 %v828, %v827
      %v844 = vpack.c.b16 %v830, %v829
      %v845 = vpack.c.b16 %v832, %v831
      %v846 = vpack.c.b16 %v834, %v833
      %v847 = vpack.c.b16 %v836, %v835
      %v848 = vpack.c.b16 %v838, %v837
      %v849 = vpack.c.b16 %v840, %v839
      %v850 = vpack.c.b16 %v842, %v841
      %859 = vmatprep.subr.bf16.mxu0 0
      %860 = vmatpush1.bf16.msra.mxu0 %v843
      %861 = vmatprep.subr.bf16.mxu0 0
      %862 = vmatpush1.bf16.msra.mxu0 %v844
      %863 = vmatprep.subr.bf16.mxu0 0
      %864 = vmatpush1.bf16.msra.mxu0 %v845
      %865 = vmatprep.subr.bf16.mxu0 0
      %866 = vmatpush1.bf16.msra.mxu0 %v846
      %867 = vmatprep.subr.bf16.mxu0 0
      %868 = vmatpush1.bf16.msra.mxu0 %v847
      %869 = vmatprep.subr.bf16.mxu0 0
      %870 = vmatpush1.bf16.msra.mxu0 %v848
      %871 = vmatprep.subr.bf16.mxu0 0
      %872 = vmatpush1.bf16.msra.mxu0 %v849
      %873 = vmatprep.subr.bf16.mxu0 0
      %874 = vmatpush1.bf16.msra.mxu0 %v850
      %875 = vmatprep.subr.bf16.mxu0 0
      %876 = vmatpush1.bf16.msra.mxu0 0
      %877 = vmatprep.subr.bf16.mxu0 0
      %878 = vmatpush1.bf16.msra.mxu0 0
      %879 = vmatprep.subr.bf16.mxu0 0
      %880 = vmatpush1.bf16.msra.mxu0 0
      %881 = vmatprep.subr.bf16.mxu0 0
      %882 = vmatpush1.bf16.msra.mxu0 0
      %883 = vmatprep.subr.bf16.mxu0 0
      %884 = vmatpush1.bf16.msra.mxu0 0
      %885 = vmatprep.subr.bf16.mxu0 0
      %886 = vmatpush1.bf16.msra.mxu0 0
      %887 = vmatprep.subr.bf16.mxu0 0
      %888 = vmatpush1.bf16.msra.mxu0 0
      %889 = vmatprep.subr.bf16.mxu0 0
      %890 = vmatpush1.bf16.msra.mxu0 0
      %891 = vmatprep.mubr.bf16.mxu0 0
      %892 = vmatmul.mubr.bf16.gmra.mrb[0].mxu0 %v772
      %v893 = vpop.f32.mrb[0].mxu0
      %v894 = vadd.f32 %v809, %v893
      %v895 = vpop.f32.mrb[0].mxu0
      %v896 = vpop.f32.mrb[0].mxu0
      %v897 = vadd.f32 %v809, %v896
      %v898 = vpop.f32.mrb[0].mxu0
      %899 = vmatprep.mubr.bf16.mxu0 0
      %900 = vmatmul.mubr.bf16.gmra.mrb[0].mxu0 %v773
      %v901 = vpop.f32.mrb[0].mxu0
      %v902 = vadd.f32 %v809, %v901
      %v903 = vpop.f32.mrb[0].mxu0
      %v904 = vpop.f32.mrb[0].mxu0
      %v905 = vadd.f32 %v809, %v904
      %v906 = vpop.f32.mrb[0].mxu0
      %907 = vmatprep.mubr.bf16.mxu0 0
      %908 = vmatmul.mubr.bf16.gmra.mrb[0].mxu0 %v774
      %v909 = vpop.f32.mrb[0].mxu0
      %v910 = vadd.f32 %v809, %v909
      %v911 = vpop.f32.mrb[0].mxu0
      %v912 = vpop.f32.mrb[0].mxu0
      %v913 = vadd.f32 %v809, %v912
      %v914 = vpop.f32.mrb[0].mxu0
      %915 = vmatprep.mubr.bf16.mxu0 0
      %916 = vmatmul.mubr.bf16.gmra.mrb[0].mxu0 %v775
      %v917 = vpop.f32.mrb[0].mxu0
      %v918 = vadd.f32 %v809, %v917
      %v919 = vpop.f32.mrb[0].mxu0
      %v920 = vpop.f32.mrb[0].mxu0
      %v921 = vadd.f32 %v809, %v920
      %v922 = vpop.f32.mrb[0].mxu0
      %923 = vmatprep.mubr.bf16.mxu0 0
      %924 = vmatmul.mubr.bf16.gmra.mrb[0].mxu0 %v776
      %v925 = vpop.f32.mrb[0].mxu0
      %v926 = vadd.f32 %v809, %v925
      %v927 = vpop.f32.mrb[0].mxu0
      %v928 = vpop.f32.mrb[0].mxu0
      %v929 = vadd.f32 %v809, %v928
      %v930 = vpop.f32.mrb[0].mxu0
      %931 = vmatprep.mubr.bf16.mxu0 0
      %932 = vmatmul.mubr.bf16.gmra.mrb[0].mxu0 %v777
      %v933 = vpop.f32.mrb[0].mxu0
      %v934 = vadd.f32 %v809, %v933
      %v935 = vpop.f32.mrb[0].mxu0
      %v936 = vpop.f32.mrb[0].mxu0
      %v937 = vadd.f32 %v809, %v936
      %v938 = vpop.f32.mrb[0].mxu0
      %939 = vmatprep.mubr.bf16.mxu0 0
      %940 = vmatmul.mubr.bf16.gmra.mrb[0].mxu0 %v778
      %v941 = vpop.f32.mrb[0].mxu0
      %v942 = vadd.f32 %v809, %v941
      %v943 = vpop.f32.mrb[0].mxu0
      %v944 = vpop.f32.mrb[0].mxu0
      %v945 = vadd.f32 %v809, %v944
      %v946 = vpop.f32.mrb[0].mxu0
      %947 = vmatprep.mubr.bf16.mxu0 0
      %948 = vmatmul.mubr.bf16.gmra.mrb[0].mxu0 %v779
      %v949 = vpop.f32.mrb[0].mxu0
      %v950 = vadd.f32 %v809, %v949
      %v951 = vpop.f32.mrb[0].mxu0
      %v952 = vpop.f32.mrb[0].mxu0
      %v953 = vadd.f32 %v809, %v952
      %v954 = vpop.f32.mrb[0].mxu0
      %955 = vmatprep.mubr.bf16.mxu0 0
      %956 = vmatmul.mubr.bf16.gmra.mrb[0].mxu0 %v780
      %v957 = vpop.f32.mrb[0].mxu0
      %v958 = vadd.f32 %v809, %v957
      %v959 = vpop.f32.mrb[0].mxu0
      %v960 = vpop.f32.mrb[0].mxu0
      %v961 = vadd.f32 %v809, %v960
      %v962 = vpop.f32.mrb[0].mxu0
      %963 = vmatprep.mubr.bf16.mxu0 0
      %964 = vmatmul.mubr.bf16.gmra.mrb[0].mxu0 %v781
      %v965 = vpop.f32.mrb[0].mxu0
      %v966 = vadd.f32 %v809, %v965
      %v967 = vpop.f32.mrb[0].mxu0
      %v968 = vpop.f32.mrb[0].mxu0
      %v969 = vadd.f32 %v809, %v968
      %v970 = vpop.f32.mrb[0].mxu0
      %971 = vmatprep.mubr.bf16.mxu0 0
      %972 = vmatmul.mubr.bf16.gmra.mrb[0].mxu0 %v782
      %v973 = vpop.f32.mrb[0].mxu0
      %v974 = vadd.f32 %v809, %v973
      %v975 = vpop.f32.mrb[0].mxu0
      %v976 = vpop.f32.mrb[0].mxu0
      %v977 = vadd.f32 %v809, %v976
      %v978 = vpop.f32.mrb[0].mxu0
      %979 = vmatprep.mubr.bf16.mxu0 0
      %980 = vmatmul.mubr.bf16.gmra.mrb[0].mxu0 %v783
      %v981 = vpop.f32.mrb[0].mxu0
      %v982 = vadd.f32 %v809, %v981
      %v983 = vpop.f32.mrb[0].mxu0
      %v984 = vpop.f32.mrb[0].mxu0
      %v985 = vadd.f32 %v809, %v984
      %v986 = vpop.f32.mrb[0].mxu0
      %987 = vmatprep.mubr.bf16.mxu0 0
      %988 = vmatmul.mubr.bf16.gmra.mrb[0].mxu0 %v784
      %v989 = vpop.f32.mrb[0].mxu0
      %v990 = vadd.f32 %v809, %v989
      %v991 = vpop.f32.mrb[0].mxu0
      %v992 = vpop.f32.mrb[0].mxu0
      %v993 = vadd.f32 %v809, %v992
      %v994 = vpop.f32.mrb[0].mxu0
      %995 = vmatprep.mubr.bf16.mxu0 0
      %996 = vmatmul.mubr.bf16.gmra.mrb[0].mxu0 %v785
      %v997 = vpop.f32.mrb[0].mxu0
      %v998 = vadd.f32 %v809, %v997
      %v999 = vpop.f32.mrb[0].mxu0
      %v1000 = vpop.f32.mrb[0].mxu0
      %v1001 = vadd.f32 %v809, %v1000
      %v1002 = vpop.f32.mrb[0].mxu0
      %1003 = vmatprep.mubr.bf16.mxu0 0
      %1004 = vmatmul.mubr.bf16.gmra.mrb[0].mxu0 %v786
      %v1005 = vpop.f32.mrb[0].mxu0
      %v1006 = vadd.f32 %v809, %v1005
      %v1007 = vpop.f32.mrb[0].mxu0
      %v1008 = vpop.f32.mrb[0].mxu0
      %v1009 = vadd.f32 %v809, %v1008
      %v1010 = vpop.f32.mrb[0].mxu0
      %1011 = vmatprep.mubr.bf16.mxu0 0
      %1012 = vmatmul.mubr.bf16.gmra.mrb[0].mxu0 %v787
      %v1013 = vpop.f32.mrb[0].mxu0
      %v1014 = vadd.f32 %v809, %v1013
      %v1015 = vpop.f32.mrb[0].mxu0
      %v1016 = vpop.f32.mrb[0].mxu0
      %v1017 = vadd.f32 %v809, %v1016
      %v1018 = vpop.f32.mrb[0].mxu0
      %1019 = vdwg.mxu0
      %1020 = vst [vmem:[%s346] sm:$0xff] %v894
      %1021 = vst [vmem:[%s346 + $0x8] sm:$0xff] %v897
      %1022 = vst [vmem:[%s346 + $0x10] sm:$0xff] %v902
      %1023 = vst [vmem:[%s346 + $0x18] sm:$0xff] %v905
      %1024 = vst [vmem:[%s346 + $0x20] sm:$0xff] %v910
      %1025 = vst [vmem:[%s346 + $0x28] sm:$0xff] %v913
      %1026 = vst [vmem:[%s346 + $0x30] sm:$0xff] %v918
      %1027 = vst [vmem:[%s346 + $0x38] sm:$0xff] %v921
      %1028 = vst [vmem:[%s346 + $0x40] sm:$0xff] %v926
      %1029 = vst [vmem:[%s346 + $0x48] sm:$0xff] %v929
      %1030 = vst [vmem:[%s346 + $0x50] sm:$0xff] %v934
      %1031 = vst [vmem:[%s346 + $0x58] sm:$0xff] %v937
      %1032 = vst [vmem:[%s346 + $0x60] sm:$0xff] %v942
      %1033 = vst [vmem:[%s346 + $0x68] sm:$0xff] %v945
      %1034 = vst [vmem:[%s346 + $0x70] sm:$0xff] %v950
      %1035 = vst [vmem:[%s346 + $0x78] sm:$0xff] %v953
      %1036 = vst [vmem:[%s346 + $0x80] sm:$0xff] %v958
      %1037 = vst [vmem:[%s346 + $0x88] sm:$0xff] %v961
      %1038 = vst [vmem:[%s346 + $0x90] sm:$0xff] %v966
      %1039 = vst [vmem:[%s346 + $0x98] sm:$0xff] %v969
      %1040 = vst [vmem:[%s346 + $0xa0] sm:$0xff] %v974
      %1041 = vst [vmem:[%s346 + $0xa8] sm:$0xff] %v977
      %1042 = vst [vmem:[%s346 + $0xb0] sm:$0xff] %v982
      %1043 = vst [vmem:[%s346 + $0xb8] sm:$0xff] %v985
      %1044 = vst [vmem:[%s346 + $0xc0] sm:$0xff] %v990
      %1045 = vst [vmem:[%s346 + $0xc8] sm:$0xff] %v993
      %1046 = vst [vmem:[%s346 + $0xd0] sm:$0xff] %v998
      %1047 = vst [vmem:[%s346 + $0xd8] sm:$0xff] %v1001
      %1048 = vst [vmem:[%s346 + $0xe0] sm:$0xff] %v1006
      %1049 = vst [vmem:[%s346 + $0xe8] sm:$0xff] %v1009
      %1050 = vst [vmem:[%s346 + $0xf0] sm:$0xff] %v1014
      %1051 = vst [vmem:[%s346 + $0xf8] sm:$0xff] %v1017
      %s1052 = smul.u32 32, %s18
      %p1053 = scmp.lt.s32.totalorder %s1052, 63
      %s1054 = scalar_select %p1053, %s1052, 63
      %s1055 = smul.addr %s1054, 8
      %s1056 = scalar_lea.vmem %s7, %s1055
      // Predicated region
      $region49: #{segformer_head_forward.9} parent=47 // pred_check
        %p1057 = pneg %p203
      $region50: #{segformer_head_forward.9} parent=47 // pred_check_branch
        %1059 = sbr.rel (%p1057) target = $region52
      $region51: #{segformer_head_forward.9} parent=47 // pred_region
        %s1060 = smul.u32 32, %s18
      $region52: #{segformer_head_forward.9} parent=47 // pred_fallthru
        _
    $region48: #{segformer_head_forward.9} parent=5 // pred_fallthru
      _
    %p1061 = scmp.le.s32.totalorder 2, %s13
    // Predicated region
    $region53: #{segformer_head_forward.9} parent=5 // pred_check
      %p1062 = pneg %p1061
    $region54: #{segformer_head_forward.9} parent=5 // pred_check_branch
      %1064 = sbr.rel (%p1062) target = $region56
    $region55: #{segformer_head_forward.9} parent=5 // pred_region
      %s1065 = ssub.s32 %s13, 2
      // Predicated region
      $region57: #{segformer_head_forward.9} parent=55 // pred_check
        %p1066 = pneg %p209
      $region58: #{segformer_head_forward.9} parent=55 // pred_check_branch
        %1068 = sbr.rel (%p1066) target = $region60
      $region59: #{segformer_head_forward.9} parent=55 // pred_region
        %s1069 = smul.u32 32, %s19
        %p1070 = scmp.lt.s32.totalorder %s1069, 63
        %s1071 = scalar_select %p1070, %s1069, 63
        %s1072 = smul.addr %s1071, 8
        %s1073 = scalar_lea.vmem %s7, %s1072
      $region60: #{segformer_head_forward.9} parent=55 // pred_fallthru
        _
    $region56: #{segformer_head_forward.9} parent=5 // pred_fallthru
      _
  $region6: #{segformer_head_forward.9} parent=0 // loop_footer
    %s17 = sadd.s32 1, %s13
  $region7: #{segformer_head_forward.9} parent=0 // loop_footer_branch
    %12 = sbr.rel target = $region3
  $region8: #{segformer_head_forward.9} parent=0 // loop_exit
    _

</llo_original>
